<compile_context>
chip_gen: v7x
topology: tpu7x:2x2x1
jax: 0.10.0
libtpu: 0.0.40
codegen_flags: <defaults>
</compile_context>

<pallas_src>
import jax
import jax.numpy as jnp
from jax import lax
from jax.experimental import pallas as pl
from jax.experimental.pallas import tpu as pltpu


def _initial_block_kernel(
    x_body_ref,    # (1, THo, Wp2, 4*Cin)  bf16  zero-padded space-to-depth input
    x_halo_ref,    # (1, 1,   Wp2, 4*Cin)  bf16  one-row halo below the tile
    w_ref,         # (Cout, 17*Cin)        bf16  im2col conv weight + pool identity
    scale_ref,     # (Cout, 1)             f32   folded BN scale
    bias_ref,      # (Cout, 1)             f32   folded BN bias
    prelu_ref,     # (1,)                  f32   PReLU slope (SMEM)
    out_ref,       # (1, Cout, THo*Wo)           lane-dense output tile
):
    _, THo, Wp2, C4 = x_body_ref.shape
    Cin = C4 // 4
    Wo = Wp2 - 1
    P = THo * Wo                                     # pixels per grid step

    # (THo+1, Wp2, 4*Cin) window = body rows + 1 halo row.
    # TODO(synk): this concatenate materializes one tile-sized VMEM copy; an
    # overlapping (THo+1)-row BlockSpec would avoid it but is not expressible
    # with plain Blocked index maps.
    xw = jnp.concatenate([x_body_ref[0], x_halo_ref[0]], axis=0)

    # Four stride-1 shifted full-channel windows of the s2d slab; with the four
    # parity channel groups they cover all 9 taps of the 3x3/stride-2 conv.
    p00 = xw[0:THo, 0:Wo, :].reshape(P, C4)
    p01 = xw[0:THo, 1:Wo + 1, :].reshape(P, C4)
    p10 = xw[1:THo + 1, 0:Wo, :].reshape(P, C4)
    p11 = xw[1:THo + 1, 1:Wo + 1, :].reshape(P, C4)

    # ---------------- ext branch: 3x3 stride-2 max pool (f32, VPU) ----------
    # The slab is ZERO padded (what the conv needs).  For the pool, padded taps
    # must be excluded: the top pad row affects only global output row 0 (the
    # row-parity-0 groups of p00/p01) and the left pad column only output
    # column 0 (the col-parity-0 groups of p00/p10); bottom/right pads are
    # never read on even H,W.  Every window keeps >= 4 real taps, so the
    # masked -1e30 can never survive the max (result is always a real value).
    NEG = jnp.float32(-1e30)
    q00 = p00.astype(jnp.float32)
    q01 = p01.astype(jnp.float32)
    q10 = p10.astype(jnp.float32)
    q11 = p11.astype(jnp.float32)

    pix = lax.broadcasted_iota(jnp.int32, (P, 1), 0)
    col0 = (pix % Wo) == 0                                     # output column 0
    row0 = jnp.logical_and(pix < Wo, pl.program_id(1) == 0)    # global output row 0

    g00_0 = jnp.where(jnp.logical_or(row0, col0), NEG, q00[:, 0 * Cin:1 * Cin])
    g00_1 = jnp.where(row0, NEG, q00[:, 1 * Cin:2 * Cin])
    g00_2 = jnp.where(col0, NEG, q00[:, 2 * Cin:3 * Cin])
    g00_3 = q00[:, 3 * Cin:4 * Cin]
    g01_0 = jnp.where(row0, NEG, q01[:, 0 * Cin:1 * Cin])
    g01_2 = q01[:, 2 * Cin:3 * Cin]
    g10_0 = jnp.where(col0, NEG, q10[:, 0 * Cin:1 * Cin])
    g10_1 = q10[:, 1 * Cin:2 * Cin]
    g11_0 = q11[:, 0 * Cin:1 * Cin]
    pool = jnp.maximum(
        jnp.maximum(jnp.maximum(g00_0, g00_1), jnp.maximum(g00_2, g00_3)),
        jnp.maximum(jnp.maximum(g01_0, g01_2),
                    jnp.maximum(jnp.maximum(g10_0, g10_1), g11_0)))   # (P, Cin)

    # ---------------- main branch + pool routing: ONE MXU matmul ------------
    # cols: (P, 17*Cin) = 16*Cin im2col conv columns + Cin pool columns; the
    # identity block in w_ref routes the pool (exact in bf16: max of bf16
    # inputs) to the last Cin output channels.  bf16 MXU operands, f32 acc.
    cols = jnp.concatenate(
        [p00, p01, p10, p11, pool.astype(jnp.bfloat16)], axis=-1)
    y = lax.dot_general(w_ref[...], cols, (((1,), (1,)), ((), ())),
                        preferred_element_type=jnp.float32)   # (Cout, P)

    # ---------------- folded BatchNorm + PReLU ------------------------------
    y = y * scale_ref[...] + bias_ref[...]
    a = prelu_ref[0]
    y = jnp.where(y >= 0, y, a * y)

    out_ref[0] = y.astype(out_ref.dtype)             # dense 128-lane stores


def _space_to_depth_pad(x_nhwc):
    """Zero-pad spatially by 1, then space-to-depth by 2.

    (N, H, W, Cin) -> (N, H//2 + 1, W//2 + 1, 4*Cin); channel order is
    (row_parity, col_parity, cin).  Stride-2 3x3 taps of the padded input
    become stride-1 shifted reads of this tensor.
    """
    N, H, W, Cin = x_nhwc.shape
    xp = jnp.pad(x_nhwc, ((0, 0), (1, 1), (1, 1), (0, 0)))
    Hp, Wp = H + 2, W + 2
    xp = xp.reshape(N, Hp // 2, 2, Wp // 2, 2, Cin)
    xp = xp.transpose(0, 1, 3, 2, 4, 5)
    return xp.reshape(N, Hp // 2, Wp // 2, 4 * Cin)


def _build_fused_weight(w_conv, cin):
    """(Cmain, Cin, 3, 3) torch conv weight -> (Cout, 17*Cin) matrix matching
    the kernel's [4 shifted windows x parity groups | pool] column order.
    Rows Cmain..Cout-1 carry an identity over the pool columns."""
    Cmain = w_conv.shape[0]
    Cout = Cmain + cin
    w = jnp.zeros((Cout, 17 * cin), jnp.float32)
    for ky in range(3):
        for kx in range(3):
            piece = (ky // 2) * 2 + (kx // 2)       # which shifted window
            grp = (ky % 2) * 2 + (kx % 2)           # which parity channel group
            k0 = (piece * 4 + grp) * cin
            w = w.at[:Cmain, k0:k0 + cin].set(w_conv[:, :, ky, kx])
    w = w.at[Cmain:, 16 * cin:].set(jnp.eye(cin, dtype=jnp.float32))
    return w


def _pick_row_tile(Ho, Wo, Cin, Cout, n_batch, vmem_budget_bytes=20 * 1024 * 1024):
    """Largest output-row tile whose per-step footprint (double-buffered HBM
    blocks + lane-padded in-kernel temporaries) fits the budget.  Budget is
    sized for the smallest-VMEM generation (v7x, 64 MiB physical)."""
    Wp2 = Wo + 1
    wp2_pad = -(-Wp2 // 16) * 16                     # bf16 sublane tile
    c4_pad = -(-(4 * Cin) // 128) * 128              # lane dim pads to 128

    def step_bytes(tho):
        p = tho * Wo
        body = tho * wp2_pad * c4_pad * 2            # body block in VMEM (bf16)
        halo = wp2_pad * c4_pad * 2
        outb = Cout * p * 4
        inter = 8 * p * c4_pad * 4                   # ~8 live (P, .) f32 temporaries
        return 2 * (body + halo + outb) + inter

    cands = [d for d in range(Ho, 0, -1)
             if Ho % d == 0 and ((d * Wo) % 128 == 0 or d == Ho)]
    tho = next((d for d in cands if step_bytes(d) <= vmem_budget_bytes), cands[-1])
    # v7x has 2 TensorCores sharing "parallel" grid axes: keep >= 2 grid steps
    # when batch == 1.
    if n_batch == 1 and tho == Ho:
        smaller = [d for d in cands if d < Ho and step_bytes(d) <= vmem_budget_bytes]
        if smaller:
            tho = smaller[0]
    return tho


def initial_block(x_nchw, params, row_tile=None, out_dtype=jnp.float32):
    """Fused InitialBlock forward.  x: (N, Cin, H, W) f32 -> (N, Cout, H/2, W/2)."""
    N, Cin, H, W = x_nchw.shape
    assert H % 2 == 0 and W % 2 == 0, "stride-2 block expects even spatial dims"
    # TODO(synk): W % 32 keeps the in-kernel reshapes layout-preserving; general
    # widths would need a padded-W path.
    assert W % 32 == 0, "kernel assumes W is a multiple of 32"
    Ho, Wo = H // 2, W // 2
    Cmain = params["w_conv"].shape[0]
    Cout = Cmain + Cin
    assert params["scale"].shape == (Cout, 1)

    THo = row_tile if row_tile else _pick_row_tile(Ho, Wo, Cin, Cout, N)
    if not (THo and Ho % THo == 0 and ((THo * Wo) % 128 == 0 or THo == Ho)):
        THo = Ho                                      # full-dim blocks always legal
    T = Ho // THo

    # Single bf16 zero-padded space-to-depth slab shared by conv and pool.
    # TODO(synk): pad + s2d could move fully in-kernel (raw NHWC input) to
    # remove this wrapper pass entirely.
    x = jnp.transpose(x_nchw.astype(jnp.bfloat16), (0, 2, 3, 1))      # NHWC bf16
    xc = _space_to_depth_pad(x)                       # (N, Ho+1, Wo+1, 4*Cin)

    w_mat = _build_fused_weight(params["w_conv"], Cin).astype(jnp.bfloat16)

    Wp2, C4 = Wo + 1, 4 * Cin
    out_isz = jnp.dtype(out_dtype).itemsize

    cost = pl.CostEstimate(
        flops=2 * N * Ho * Wo * (17 * Cin) * Cout + 8 * N * Ho * Wo * Cout,
        transcendentals=0,
        bytes_accessed=int(xc.size * 2 + N * Cout * Ho * Wo * out_isz
                           + w_mat.size * 2 + (2 * Cout + 1) * 4),
    )

    body_map = lambda n, t: (n, t, 0, 0)
    halo_map = lambda n, t: (n, (t + 1) * THo, 0, 0)   # 1-row halo below the tile

    out = pl.pallas_call(
        _initial_block_kernel,
        out_shape=jax.ShapeDtypeStruct((N, Cout, Ho * Wo), out_dtype),
        grid=(N, T),
        in_specs=[
            pl.BlockSpec((1, THo, Wp2, C4), body_map),             # input body
            pl.BlockSpec((1, 1, Wp2, C4), halo_map),               # input halo row
            pl.BlockSpec((Cout, 17 * Cin), lambda n, t: (0, 0)),   # fused weight
            pl.BlockSpec((Cout, 1), lambda n, t: (0, 0)),          # BN scale
            pl.BlockSpec((Cout, 1), lambda n, t: (0, 0)),          # BN bias
            pl.BlockSpec(memory_space=pltpu.MemorySpace.SMEM),     # PReLU slope
        ],
        out_specs=pl.BlockSpec((1, Cout, THo * Wo), lambda n, t: (n, 0, t)),
        compiler_params=pltpu.CompilerParams(
            dimension_semantics=("parallel", "parallel"),
            # Tile budget (~20 MiB) + double buffering stays well under v7x's
            # 64 MiB physical VMEM; do not raise toward 64 MiB on v7x.
            vmem_limit_bytes=32 * 1024 * 1024),
        cost_estimate=cost,
    )(xc, xc, w_mat, params["scale"], params["bias"], params["prelu"])

    # Output is already channel-major: NCHW is a free metadata reshape.
    return out.reshape(N, Cout, Ho, Wo)


def init_params(key, in_channels, out_channels):
    """Deterministic synthetic parameters matching the module's shapes.
    (The module's BatchNorm2d(out_channels) implicitly assumes in_channels==3.)"""
    Cmain = out_channels - 3
    Cout = Cmain + in_channels
    keys = jax.random.split(key, 5)
    eps = 1e-5
    w_conv = 0.3 * jax.random.normal(keys[0], (Cmain, in_channels, 3, 3),
                                     jnp.float32)
    gamma = 1.0 + 0.1 * jax.random.normal(keys[1], (Cout,), jnp.float32)
    beta = 0.1 * jax.random.normal(keys[2], (Cout,), jnp.float32)
    mean = 0.1 * jax.random.normal(keys[3], (Cout,), jnp.float32)
    var = 1.0 + 0.1 * jnp.abs(jax.random.normal(keys[4], (Cout,), jnp.float32))
    scale = gamma / jnp.sqrt(var + eps)
    bias = beta - mean * scale
    prelu = jnp.full((1,), 0.25, jnp.float32)        # nn.PReLU() default init
    return dict(w_conv=w_conv,
                scale=scale.reshape(Cout, 1),
                bias=bias.reshape(Cout, 1),
                prelu=prelu)


def reference_forward(x_nchw, params):
    """Pure-JAX (XLA conv / reduce_window) reference of the same forward."""
    x = jnp.transpose(x_nchw, (0, 2, 3, 1)).astype(jnp.float32)      # NHWC
    w = jnp.transpose(params["w_conv"], (2, 3, 1, 0))                # HWIO
    main = lax.conv_general_dilated(
        x, w, window_strides=(2, 2), padding=((1, 1), (1, 1)),
        dimension_numbers=("NHWC", "HWIO", "NHWC"))
    ext = lax.reduce_window(
        x, -jnp.inf, lax.max,
        window_dimensions=(1, 3, 3, 1), window_strides=(1, 2, 2, 1),
        padding=((0, 0), (1, 1), (1, 1), (0, 0)))
    y = jnp.concatenate([main, ext], axis=-1)
    y = y * params["scale"][:, 0] + params["bias"][:, 0]
    a = params["prelu"][0]
    y = jnp.where(y >= 0, y, a * y)
    return jnp.transpose(y, (0, 3, 1, 2))


if __name__ == "__main__":
    key = jax.random.PRNGKey(0)
    kx, kp = jax.random.split(key)

    # Small RGB input; in_channels=3 is implied by the module's BN sizing.
    N, Cin, H, W = 2, 3, 32, 32
    out_channels = 16
    x = jax.random.normal(kx, (N, Cin, H, W), jnp.float32)
    params = init_params(kp, Cin, out_channels)

    out = initial_block(x, params)                 # auto row tile, grid=(N, T)
    out = jax.block_until_ready(out)
    assert out.shape == (N, out_channels, H // 2, W // 2)

    ref = reference_forward(x, params)
    if not jnp.allclose(out, ref, atol=2e-2, rtol=2e-2):   # bf16 MXU operands
        raise AssertionError(
            f"mismatch, max abs diff = {float(jnp.max(jnp.abs(out - ref)))}")

    print("KERNEL_OK")
</pallas_src>

<mosaic_0001>
module attributes {stable_mosaic.version = 11 : i64} {
  func.func @_initial_block_kernel(%arg0: i32, %arg1: i32, %arg2: memref<1x16x17x12xbf16, #tpu.memory_space<vmem>>, %arg3: memref<1x1x17x12xbf16, #tpu.memory_space<vmem>>, %arg4: memref<16x51xbf16, #tpu.memory_space<vmem>>, %arg5: memref<16x1xf32, #tpu.memory_space<vmem>>, %arg6: memref<16x1xf32, #tpu.memory_space<vmem>>, %arg7: memref<1xf32, #tpu.memory_space<smem>>, %arg8: memref<1x16x256xf32, #tpu.memory_space<vmem>>) attributes {dimension_semantics = [#tpu.dimension_semantics<parallel>, #tpu.dimension_semantics<parallel>], iteration_bounds = array<i64: 2, 1>, scalar_prefetch = 0 : i64, scratch_operands = 0 : i64, tpu.core_type = #tpu.core_type<tc>, window_params = [{transform_indices = @transform_0, window_bounds = array<i64: 1, 16, 17, 12>}, {transform_indices = @transform_1, window_bounds = array<i64: 1, 1, 17, 12>}, {pipeline_mode = #tpu.pipeline_mode<synchronous>, transform_indices = @transform_2, window_bounds = array<i64: 16, 51>}, {pipeline_mode = #tpu.pipeline_mode<synchronous>, transform_indices = @transform_3, window_bounds = array<i64: 16, 1>}, {pipeline_mode = #tpu.pipeline_mode<synchronous>, transform_indices = @transform_4, window_bounds = array<i64: 16, 1>}, {transform_indices = @transform_5, window_bounds = array<i64: 1>}, {transform_indices = @transform_6, window_bounds = array<i64: 1, 16, 256>}]} {
    %c0 = arith.constant 0 : index
    %c0_0 = arith.constant 0 : index
    %c0_1 = arith.constant 0 : index
    %c0_2 = arith.constant 0 : index
    %0 = vector.load %arg2[%c0, %c0_0, %c0_1, %c0_2] : memref<1x16x17x12xbf16, #tpu.memory_space<vmem>>, vector<1x16x17x12xbf16>
    %1 = vector.shape_cast %0 : vector<1x16x17x12xbf16> to vector<16x17x12xbf16>
    %c0_3 = arith.constant 0 : index
    %c0_4 = arith.constant 0 : index
    %c0_5 = arith.constant 0 : index
    %c0_6 = arith.constant 0 : index
    %2 = vector.load %arg3[%c0_3, %c0_4, %c0_5, %c0_6] : memref<1x1x17x12xbf16, #tpu.memory_space<vmem>>, vector<1x1x17x12xbf16>
    %3 = vector.shape_cast %2 : vector<1x1x17x12xbf16> to vector<1x17x12xbf16>
    %4 = tpu.concatenate %1, %3 in 0 : vector<16x17x12xbf16>, vector<1x17x12xbf16> -> vector<17x17x12xbf16>
    %5 = vector.extract_strided_slice %4 {offsets = [0, 0, 0], sizes = [16, 16, 12], strides = [1, 1, 1]} : vector<17x17x12xbf16> to vector<16x16x12xbf16>
    %6 = vector.shape_cast %5 : vector<16x16x12xbf16> to vector<256x12xbf16>
    %7 = vector.extract_strided_slice %4 {offsets = [0, 1, 0], sizes = [16, 16, 12], strides = [1, 1, 1]} : vector<17x17x12xbf16> to vector<16x16x12xbf16>
    %8 = vector.shape_cast %7 : vector<16x16x12xbf16> to vector<256x12xbf16>
    %9 = vector.extract_strided_slice %4 {offsets = [1, 0, 0], sizes = [16, 16, 12], strides = [1, 1, 1]} : vector<17x17x12xbf16> to vector<16x16x12xbf16>
    %10 = vector.shape_cast %9 : vector<16x16x12xbf16> to vector<256x12xbf16>
    %11 = vector.extract_strided_slice %4 {offsets = [1, 1, 0], sizes = [16, 16, 12], strides = [1, 1, 1]} : vector<17x17x12xbf16> to vector<16x16x12xbf16>
    %12 = vector.shape_cast %11 : vector<16x16x12xbf16> to vector<256x12xbf16>
    %13 = arith.extf %6 : vector<256x12xbf16> to vector<256x12xf32>
    %14 = arith.extf %8 : vector<256x12xbf16> to vector<256x12xf32>
    %15 = arith.extf %10 : vector<256x12xbf16> to vector<256x12xf32>
    %16 = arith.extf %12 : vector<256x12xbf16> to vector<256x12xf32>
    %17 = tpu.iota {dimensions = array<i32: 0>} : vector<256x1xi32>
    %c16_i32 = arith.constant 16 : i32
    %c0_i32 = arith.constant 0 : i32
    %18 = arith.cmpi eq, %c16_i32, %c0_i32 : i32
    %c1_i32 = arith.constant 1 : i32
    %19 = arith.select %18, %c1_i32, %c16_i32 : i32
    %20 = vector.broadcast %19 : i32 to vector<256x1xi32>
    %21 = arith.remsi %17, %20 : vector<256x1xi32>
    %c0_i32_7 = arith.constant 0 : i32
    %22 = vector.broadcast %c0_i32_7 : i32 to vector<256x1xi32>
    %23 = arith.cmpi ne, %21, %22 : vector<256x1xi32>
    %c0_i32_8 = arith.constant 0 : i32
    %24 = vector.broadcast %c0_i32_8 : i32 to vector<256x1xi32>
    %25 = arith.cmpi slt, %21, %24 : vector<256x1xi32>
    %c0_i32_9 = arith.constant 0 : i32
    %26 = arith.cmpi slt, %19, %c0_i32_9 : i32
    %27 = vector.broadcast %26 : i1 to vector<256x1xi1>
    %28 = vector.broadcast %27 : vector<256x1xi1> to vector<256x1xi1>
    %29 = arith.xori %25, %28 : vector<256x1xi1>
    %30 = arith.andi %29, %23 : vector<256x1xi1>
    %31 = vector.broadcast %19 : i32 to vector<256x1xi32>
    %32 = arith.addi %21, %31 : vector<256x1xi32>
    %33 = arith.select %30, %32, %21 : vector<256x1xi1>, vector<256x1xi32>
    %c0_i32_10 = arith.constant 0 : i32
    %34 = vector.broadcast %c0_i32_10 : i32 to vector<256x1xi32>
    %35 = arith.cmpi eq, %33, %34 : vector<256x1xi32>
    %c16_i32_11 = arith.constant 16 : i32
    %36 = vector.broadcast %c16_i32_11 : i32 to vector<256x1xi32>
    %37 = arith.cmpi slt, %17, %36 : vector<256x1xi32>
    %c0_i32_12 = arith.constant 0 : i32
    %38 = arith.cmpi eq, %arg1, %c0_i32_12 : i32
    %39 = vector.broadcast %38 : i1 to vector<256x1xi1>
    %40 = arith.andi %37, %39 : vector<256x1xi1>
    %41 = arith.ori %40, %35 : vector<256x1xi1>
    %42 = vector.extract_strided_slice %13 {offsets = [0, 0], sizes = [256, 3], strides = [1, 1]} : vector<256x12xf32> to vector<256x3xf32>
    %cst = arith.constant -1.000000e+30 : f32
    %43 = vector.shape_cast %41 : vector<256x1xi1> to vector<256x1xi1>
    %44 = vector.broadcast %43 : vector<256x1xi1> to vector<256x3xi1>
    %45 = vector.broadcast %cst : f32 to vector<256x3xf32>
    %46 = arith.select %44, %45, %42 : vector<256x3xi1>, vector<256x3xf32>
    %47 = vector.extract_strided_slice %13 {offsets = [0, 3], sizes = [256, 3], strides = [1, 1]} : vector<256x12xf32> to vector<256x3xf32>
    %cst_13 = arith.constant -1.000000e+30 : f32
    %48 = vector.shape_cast %40 : vector<256x1xi1> to vector<256x1xi1>
    %49 = vector.broadcast %48 : vector<256x1xi1> to vector<256x3xi1>
    %50 = vector.broadcast %cst_13 : f32 to vector<256x3xf32>
    %51 = arith.select %49, %50, %47 : vector<256x3xi1>, vector<256x3xf32>
    %52 = vector.extract_strided_slice %13 {offsets = [0, 6], sizes = [256, 3], strides = [1, 1]} : vector<256x12xf32> to vector<256x3xf32>
    %cst_14 = arith.constant -1.000000e+30 : f32
    %53 = vector.shape_cast %35 : vector<256x1xi1> to vector<256x1xi1>
    %54 = vector.broadcast %53 : vector<256x1xi1> to vector<256x3xi1>
    %55 = vector.broadcast %cst_14 : f32 to vector<256x3xf32>
    %56 = arith.select %54, %55, %52 : vector<256x3xi1>, vector<256x3xf32>
    %57 = vector.extract_strided_slice %13 {offsets = [0, 9], sizes = [256, 3], strides = [1, 1]} : vector<256x12xf32> to vector<256x3xf32>
    %58 = vector.extract_strided_slice %14 {offsets = [0, 0], sizes = [256, 3], strides = [1, 1]} : vector<256x12xf32> to vector<256x3xf32>
    %cst_15 = arith.constant -1.000000e+30 : f32
    %59 = vector.shape_cast %40 : vector<256x1xi1> to vector<256x1xi1>
    %60 = vector.broadcast %59 : vector<256x1xi1> to vector<256x3xi1>
    %61 = vector.broadcast %cst_15 : f32 to vector<256x3xf32>
    %62 = arith.select %60, %61, %58 : vector<256x3xi1>, vector<256x3xf32>
    %63 = vector.extract_strided_slice %14 {offsets = [0, 6], sizes = [256, 3], strides = [1, 1]} : vector<256x12xf32> to vector<256x3xf32>
    %64 = vector.extract_strided_slice %15 {offsets = [0, 0], sizes = [256, 3], strides = [1, 1]} : vector<256x12xf32> to vector<256x3xf32>
    %cst_16 = arith.constant -1.000000e+30 : f32
    %65 = vector.shape_cast %35 : vector<256x1xi1> to vector<256x1xi1>
    %66 = vector.broadcast %65 : vector<256x1xi1> to vector<256x3xi1>
    %67 = vector.broadcast %cst_16 : f32 to vector<256x3xf32>
    %68 = arith.select %66, %67, %64 : vector<256x3xi1>, vector<256x3xf32>
    %69 = vector.extract_strided_slice %15 {offsets = [0, 3], sizes = [256, 3], strides = [1, 1]} : vector<256x12xf32> to vector<256x3xf32>
    %70 = vector.extract_strided_slice %16 {offsets = [0, 0], sizes = [256, 3], strides = [1, 1]} : vector<256x12xf32> to vector<256x3xf32>
    %71 = arith.maximumf %46, %51 : vector<256x3xf32>
    %72 = arith.maximumf %56, %57 : vector<256x3xf32>
    %73 = arith.maximumf %71, %72 : vector<256x3xf32>
    %74 = arith.maximumf %62, %63 : vector<256x3xf32>
    %75 = arith.maximumf %68, %69 : vector<256x3xf32>
    %76 = arith.maximumf %75, %70 : vector<256x3xf32>
    %77 = arith.maximumf %74, %76 : vector<256x3xf32>
    %78 = arith.maximumf %73, %77 : vector<256x3xf32>
    %79 = arith.truncf %78 : vector<256x3xf32> to vector<256x3xbf16>
    %80 = tpu.concatenate %6, %8, %10, %12, %79 in 1 : vector<256x12xbf16>, vector<256x12xbf16>, vector<256x12xbf16>, vector<256x12xbf16>, vector<256x3xbf16> -> vector<256x51xbf16>
    %c0_17 = arith.constant 0 : index
    %c0_18 = arith.constant 0 : index
    %81 = vector.load %arg4[%c0_17, %c0_18] : memref<16x51xbf16, #tpu.memory_space<vmem>>, vector<16x51xbf16>
    %cst_19 = arith.constant dense<0.000000e+00> : vector<16x256xf32>
    %82 = tpu.matmul %81, %80, %cst_19 {dimension_numbers = #tpu.dot_dimension_numbers<[1], [1], [0], [0], [0, 0, 1, 0], [], []>} : vector<16x51xbf16>, vector<256x51xbf16>, vector<16x256xf32> -> vector<16x256xf32>
    %c0_20 = arith.constant 0 : index
    %c0_21 = arith.constant 0 : index
    %83 = vector.load %arg5[%c0_20, %c0_21] : memref<16x1xf32, #tpu.memory_space<vmem>>, vector<16x1xf32>
    %84 = vector.broadcast %83 : vector<16x1xf32> to vector<16x256xf32>
    %85 = arith.mulf %82, %84 : vector<16x256xf32>
    %c0_22 = arith.constant 0 : index
    %c0_23 = arith.constant 0 : index
    %86 = vector.load %arg6[%c0_22, %c0_23] : memref<16x1xf32, #tpu.memory_space<vmem>>, vector<16x1xf32>
    %87 = vector.broadcast %86 : vector<16x1xf32> to vector<16x256xf32>
    %88 = arith.addf %85, %87 : vector<16x256xf32>
    %c0_24 = arith.constant 0 : index
    %89 = memref.load %arg7[%c0_24] : memref<1xf32, #tpu.memory_space<smem>>
    %cst_25 = arith.constant 0.000000e+00 : f32
    %90 = vector.broadcast %cst_25 : f32 to vector<16x256xf32>
    %91 = arith.cmpf oge, %88, %90 : vector<16x256xf32>
    %92 = vector.broadcast %89 : f32 to vector<16x256xf32>
    %93 = arith.mulf %92, %88 : vector<16x256xf32>
    %94 = arith.select %91, %88, %93 : vector<16x256xi1>, vector<16x256xf32>
    %c0_26 = arith.constant 0 : index
    %c0_27 = arith.constant 0 : index
    %c0_28 = arith.constant 0 : index
    %95 = vector.load %arg8[%c0_26, %c0_27, %c0_28] : memref<1x16x256xf32, #tpu.memory_space<vmem>>, vector<1x16x256xf32>
    %96 = vector.shape_cast %95 : vector<1x16x256xf32> to vector<16x256xf32>
    %97 = vector.shape_cast %94 : vector<16x256xf32> to vector<1x16x256xf32>
    tpu.vector_store %arg8[%c0_26, %c0_27, %c0_28], %97 {strides = array<i32>} : memref<1x16x256xf32, #tpu.memory_space<vmem>>, vector<1x16x256xf32>,
    return
  }
  func.func @transform_0(%arg0: i32, %arg1: i32) -> (i32, i32, i32, i32) {
    %c0_i32 = arith.constant 0 : i32
    %c0_i32_0 = arith.constant 0 : i32
    %c0_i32_1 = arith.constant 0 : i32
    return %arg0, %arg1, %c0_i32, %c0_i32_0 : i32, i32, i32, i32
  }
  func.func @transform_1(%arg0: i32, %arg1: i32) -> (i32, i32, i32, i32) {
    %c1_i32 = arith.constant 1 : i32
    %0 = arith.addi %arg1, %c1_i32 : i32
    %c16_i32 = arith.constant 16 : i32
    %1 = arith.muli %0, %c16_i32 : i32
    %c0_i32 = arith.constant 0 : i32
    %c0_i32_0 = arith.constant 0 : i32
    %c0_i32_1 = arith.constant 0 : i32
    return %arg0, %1, %c0_i32, %c0_i32_0 : i32, i32, i32, i32
  }
  func.func @transform_2(%arg0: i32, %arg1: i32) -> (i32, i32) {
    %c0_i32 = arith.constant 0 : i32
    %c0_i32_0 = arith.constant 0 : i32
    %c0_i32_1 = arith.constant 0 : i32
    return %c0_i32, %c0_i32_0 : i32, i32
  }
  func.func @transform_3(%arg0: i32, %arg1: i32) -> (i32, i32) {
    %c0_i32 = arith.constant 0 : i32
    %c0_i32_0 = arith.constant 0 : i32
    %c0_i32_1 = arith.constant 0 : i32
    return %c0_i32, %c0_i32_0 : i32, i32
  }
  func.func @transform_4(%arg0: i32, %arg1: i32) -> (i32, i32) {
    %c0_i32 = arith.constant 0 : i32
    %c0_i32_0 = arith.constant 0 : i32
    %c0_i32_1 = arith.constant 0 : i32
    return %c0_i32, %c0_i32_0 : i32, i32
  }
  func.func @transform_5(%arg0: i32, %arg1: i32) -> i32 {
    %c0_i32 = arith.constant 0 : i32
    %c0_i32_0 = arith.constant 0 : i32
    return %c0_i32 : i32
  }
  func.func @transform_6(%arg0: i32, %arg1: i32) -> (i32, i32, i32) {
    %c0_i32 = arith.constant 0 : i32
    %c0_i32_0 = arith.constant 0 : i32
    return %arg0, %c0_i32, %arg1 : i32, i32, i32
  }
}

</mosaic_0001>

<llo_original>
// kernel: tpu_custom_call.1
$region0: #{tpu_custom_call.1}
  #allocation0 [shape = 'u32[]', space=smem, size = 0x4, offset = 0x4, fixed_abs, tag = 'smem constant byte address 0x4 - core index']
  #allocation1 [shape = 'u32[144,128]{1,0:T(1,128)}', space=vmem, size = 0x12000, scoped, tag = 'internal scratch']
  #allocation2 [shape = 'f32[1]{0:T(128)S(6)}', space=smem, size = 0x200, scoped, tag = 'scoped memory for tpu_custom_call.1']
  %s0 = inlined_call_operand.vmem [shape: bf16[2,17,17,12], index: 0, kind: input, shape index: {}]
  %s1 = inlined_call_operand.vmem [shape: bf16[2,17,17,12], index: 1, kind: input, shape index: {}]
  %s2 = inlined_call_operand.vmem [shape: bf16[16,51], index: 2, kind: input, shape index: {}]
  %s3 = inlined_call_operand.vmem [shape: f32[16,1], index: 3, kind: input, shape index: {}]
  %s4 = inlined_call_operand.vmem [shape: f32[16,1], index: 4, kind: input, shape index: {}]
  %s5 = inlined_call_operand.<no memory space> [shape: f32[1], index: 5, kind: input, shape index: {}]
  %s6 = inlined_call_operand.hbm [shape: f32[2,16,256], index: 6, kind: output, shape index: {}]
  %s7 = sld [smem:[#allocation0]]
  $region57: #{tpu_custom_call.1} parent=0
    _
  %s9 = ssub.s32 1, %s7
  %s10 = scalar_select 0, %s9, %s7
  %11 = sst [smem:[#allocation2]] %s5
  $region1: #{tpu_custom_call.1} parent=0
    #allocation3 [shape = 'u8[32768]{0}', space=vmem, size = 0x8000, scoped, tag = 'output window, operand 0']
    #allocation4 [shape = 's32[2]{0}', space=sflag, size = 0x8, scoped, tag = 'scoped memory for tpu_custom_call.1']
    %12 = vsyncpa [#allocation4], 0
    %s13 = scalar_lea.sflag [#allocation4], 1
    %14 = vsyncpa %s13, 0
    loop: start=0, step=1, limit=4
    $region2: #{tpu_custom_call.1} parent=1 // loop_pre_header
      _
    $region3: #{tpu_custom_call.1} parent=1 // loop_header
      %s16 = sphi 0, %s20
      %p17 = scmp.ge.s32.totalorder %s16, 4
      %s23 = sphi 0, %s35
      %s24 = sphi 0, %s31
      %s25 = sphi 0, %s23
      %s26 = sphi 0, %s24
      %s27 = sphi 0, %s25
      %s28 = sphi 0, %s26
      %s40 = sphi 0, %s42
      %s43 = sphi 0, %s40
      %s44 = sphi 0, %s43
      %s60 = sphi 0, %s44
      %s72 = sphi 0, %s74
      %s75 = sphi 0, %s72
      %s76 = sphi 0, %s75
      %s92 = sphi 0, %s76
      %s96 = sphi 0, %s96
      %s98 = sphi 0, %s96
      %s99 = sphi 0, %s98
      %s113 = sphi 0, %s99
      %s117 = sphi 0, %s117
      %s119 = sphi 0, %s117
      %s120 = sphi 0, %s119
      %s134 = sphi 0, %s120
      %s138 = sphi 0, %s138
      %s140 = sphi 0, %s138
      %s141 = sphi 0, %s140
      %s155 = sphi 0, %s141
      %s159 = sphi 0, %s159
      %s161 = sphi 0, %s159
      %s162 = sphi 0, %s161
      %s176 = sphi 0, %s162
      %s184 = sphi 0, %s186
      %s187 = sphi 0, %s184
      %s188 = sphi 0, %s187
      %s204 = sphi 0, %s188
    $region4: #{tpu_custom_call.1} parent=1 // loop_header_branch
      %19 = sbr.rel (%p17) target = $region8
    $region5: #{tpu_custom_call.1} parent=1 // loop_body
      %s21 = ssub.s32 %s16, 1
      %s22 = ssub.s32 %s16, 2
      %s29 = sadd.s32 1, %s24
      %p30 = scmp.ge.s32.totalorder %s29, 1
      %s31 = scalar_select %p30, 0, %s29
      %s32 = sadd.s32 1, %s23
      %s33 = scalar_select %p30, %s32, %s23
      %p34 = scmp.ge.s32.totalorder %s33, 2
      %s35 = scalar_select %p34, 0, %s33
      %s36 = ssub.s32 %s23, %s35
      %s37 = ssub.s32 %s24, %s31
      %s38 = sor.u32 %s36, %s37
      %p39 = scmp.eq.s32.totalorder %s38, 0
      %s41 = sadd.s32 %s40, 1
      %s42 = scalar_select %p39, %s40, %s41
      %p45 = pneg %p39
      %p46 = scmp.eq.s32.totalorder %s16, 1
      %p47 = por %p45, %p46
      %p48 = scmp.ne.s32.totalorder %s40, %s43
      %p49 = scmp.eq.s32.totalorder %s16, 0
      %p50 = por %p48, %p49
      %p51 = scmp.ne.s32.totalorder %s40, %s43
      %p52 = scmp.eq.s32.totalorder %s21, 1
      %p53 = por %p51, %p52
      %p54 = scmp.ne.s32.totalorder %s43, %s44
      %p55 = scmp.eq.s32.totalorder %s21, 0
      %p56 = por %p54, %p55
      %p57 = scmp.ne.s32.totalorder %s43, %s44
      %p58 = scmp.eq.s32.totalorder %s22, 1
      %p59 = por %p57, %p58
      %p61 = scmp.ne.s32.totalorder %s44, %s60
      %p62 = scmp.eq.s32.totalorder %s22, 0
      %p63 = por %p61, %p62
      %s64 = sadd.s32 %s24, 1
      %s65 = smul.u32 %s64, 16
      %s66 = sadd.s32 %s31, 1
      %s67 = smul.u32 %s66, 16
      %s68 = ssub.s32 %s23, %s35
      %s69 = ssub.s32 %s65, %s67
      %s70 = sor.u32 %s68, %s69
      %p71 = scmp.eq.s32.totalorder %s70, 0
      %s73 = sadd.s32 %s72, 1
      %s74 = scalar_select %p71, %s72, %s73
      %p77 = pneg %p71
      %p78 = scmp.eq.s32.totalorder %s16, 1
      %p79 = por %p77, %p78
      %p80 = scmp.ne.s32.totalorder %s72, %s75
      %p81 = scmp.eq.s32.totalorder %s16, 0
      %p82 = por %p80, %p81
      %p83 = scmp.ne.s32.totalorder %s72, %s75
      %p84 = scmp.eq.s32.totalorder %s21, 1
      %p85 = por %p83, %p84
      %p86 = scmp.ne.s32.totalorder %s75, %s76
      %p87 = scmp.eq.s32.totalorder %s21, 0
      %p88 = por %p86, %p87
      %p89 = scmp.ne.s32.totalorder %s75, %s76
      %p90 = scmp.eq.s32.totalorder %s22, 1
      %p91 = por %p89, %p90
      %p93 = scmp.ne.s32.totalorder %s76, %s92
      %p94 = scmp.eq.s32.totalorder %s22, 0
      %p95 = por %p93, %p94
      %s97 = sadd.s32 %s96, 1
      %p100 = scmp.eq.s32.totalorder %s16, 1
      %p101 = scmp.ne.s32.totalorder %s96, %s98
      %p102 = scmp.eq.s32.totalorder %s16, 0
      %p103 = por %p101, %p102
      %p104 = scmp.ne.s32.totalorder %s96, %s98
      %p105 = scmp.eq.s32.totalorder %s21, 1
      %p106 = por %p104, %p105
      %p107 = scmp.ne.s32.totalorder %s98, %s99
      %p108 = scmp.eq.s32.totalorder %s21, 0
      %p109 = por %p107, %p108
      %p110 = scmp.ne.s32.totalorder %s98, %s99
      %p111 = scmp.eq.s32.totalorder %s22, 1
      %p112 = por %p110, %p111
      %p114 = scmp.ne.s32.totalorder %s99, %s113
      %p115 = scmp.eq.s32.totalorder %s22, 0
      %p116 = por %p114, %p115
      %s118 = sadd.s32 %s117, 1
      %p121 = scmp.eq.s32.totalorder %s16, 1
      %p122 = scmp.ne.s32.totalorder %s117, %s119
      %p123 = scmp.eq.s32.totalorder %s16, 0
      %p124 = por %p122, %p123
      %p125 = scmp.ne.s32.totalorder %s117, %s119
      %p126 = scmp.eq.s32.totalorder %s21, 1
      %p127 = por %p125, %p126
      %p128 = scmp.ne.s32.totalorder %s119, %s120
      %p129 = scmp.eq.s32.totalorder %s21, 0
      %p130 = por %p128, %p129
      %p131 = scmp.ne.s32.totalorder %s119, %s120
      %p132 = scmp.eq.s32.totalorder %s22, 1
      %p133 = por %p131, %p132
      %p135 = scmp.ne.s32.totalorder %s120, %s134
      %p136 = scmp.eq.s32.totalorder %s22, 0
      %p137 = por %p135, %p136
      %s139 = sadd.s32 %s138, 1
      %p142 = scmp.eq.s32.totalorder %s16, 1
      %p143 = scmp.ne.s32.totalorder %s138, %s140
      %p144 = scmp.eq.s32.totalorder %s16, 0
      %p145 = por %p143, %p144
      %p146 = scmp.ne.s32.totalorder %s138, %s140
      %p147 = scmp.eq.s32.totalorder %s21, 1
      %p148 = por %p146, %p147
      %p149 = scmp.ne.s32.totalorder %s140, %s141
      %p150 = scmp.eq.s32.totalorder %s21, 0
      %p151 = por %p149, %p150
      %p152 = scmp.ne.s32.totalorder %s140, %s141
      %p153 = scmp.eq.s32.totalorder %s22, 1
      %p154 = por %p152, %p153
      %p156 = scmp.ne.s32.totalorder %s141, %s155
      %p157 = scmp.eq.s32.totalorder %s22, 0
      %p158 = por %p156, %p157
      %s160 = sadd.s32 %s159, 1
      %p163 = scmp.eq.s32.totalorder %s16, 1
      %p164 = scmp.ne.s32.totalorder %s159, %s161
      %p165 = scmp.eq.s32.totalorder %s16, 0
      %p166 = por %p164, %p165
      %p167 = scmp.ne.s32.totalorder %s159, %s161
      %p168 = scmp.eq.s32.totalorder %s21, 1
      %p169 = por %p167, %p168
      %p170 = scmp.ne.s32.totalorder %s161, %s162
      %p171 = scmp.eq.s32.totalorder %s21, 0
      %p172 = por %p170, %p171
      %p173 = scmp.ne.s32.totalorder %s161, %s162
      %p174 = scmp.eq.s32.totalorder %s22, 1
      %p175 = por %p173, %p174
      %p177 = scmp.ne.s32.totalorder %s162, %s176
      %p178 = scmp.eq.s32.totalorder %s22, 0
      %p179 = por %p177, %p178
      %s180 = ssub.s32 %s23, %s35
      %s181 = ssub.s32 %s24, %s31
      %s182 = sor.u32 %s180, %s181
      %p183 = scmp.eq.s32.totalorder %s182, 0
      %s185 = sadd.s32 %s184, 1
      %s186 = scalar_select %p183, %s184, %s185
      %p189 = pneg %p183
      %p190 = scmp.eq.s32.totalorder %s16, 1
      %p191 = por %p189, %p190
      %p192 = scmp.ne.s32.totalorder %s184, %s187
      %p193 = scmp.eq.s32.totalorder %s16, 0
      %p194 = por %p192, %p193
      %p195 = scmp.ne.s32.totalorder %s184, %s187
      %p196 = scmp.eq.s32.totalorder %s21, 1
      %p197 = por %p195, %p196
      %p198 = scmp.ne.s32.totalorder %s187, %s188
      %p199 = scmp.eq.s32.totalorder %s21, 0
      %p200 = por %p198, %p199
      %p201 = scmp.ne.s32.totalorder %s187, %s188
      %p202 = scmp.eq.s32.totalorder %s22, 1
      %p203 = por %p201, %p202
      %p205 = scmp.ne.s32.totalorder %s188, %s204
      %p206 = scmp.eq.s32.totalorder %s22, 0
      %p207 = por %p205, %p206
      %p208 = scmp.le.s32.totalorder 1, %s16
      %p209 = scmp.lt.s32.totalorder %s16, 3
      %p210 = pnand %p208, %p209
      %p211 = pneg %p210
      // Predicated region
      $region9: #{tpu_custom_call.1} parent=5 // pred_check
        _
      $region10: #{tpu_custom_call.1} parent=5 // pred_check_branch
        %213 = sbr.rel (%p210) target = $region12
      $region11: #{tpu_custom_call.1} parent=5 // pred_region
        %s214 = ssub.s32 %s16, 1
        // Predicated region
        $region13: #{tpu_custom_call.1} parent=11 // pred_check
          %p215 = pneg %p109
        $region14: #{tpu_custom_call.1} parent=11 // pred_check_branch
          %217 = sbr.rel (%p215) target = $region16
        $region15: #{tpu_custom_call.1} parent=11 // pred_region
          _
        $region16: #{tpu_custom_call.1} parent=11 // pred_fallthru
          _
        // Predicated region
        $region17: #{tpu_custom_call.1} parent=11 // pred_check
          %p218 = pneg %p130
        $region18: #{tpu_custom_call.1} parent=11 // pred_check_branch
          %220 = sbr.rel (%p218) target = $region20
        $region19: #{tpu_custom_call.1} parent=11 // pred_region
          _
        $region20: #{tpu_custom_call.1} parent=11 // pred_fallthru
          _
        // Predicated region
        $region21: #{tpu_custom_call.1} parent=11 // pred_check
          %p221 = pneg %p151
        $region22: #{tpu_custom_call.1} parent=11 // pred_check_branch
          %223 = sbr.rel (%p221) target = $region24
        $region23: #{tpu_custom_call.1} parent=11 // pred_region
          _
        $region24: #{tpu_custom_call.1} parent=11 // pred_fallthru
          _
        // Predicated region
        $region25: #{tpu_custom_call.1} parent=11 // pred_check
          %p224 = pneg %p172
        $region26: #{tpu_custom_call.1} parent=11 // pred_check_branch
          %226 = sbr.rel (%p224) target = $region28
        $region27: #{tpu_custom_call.1} parent=11 // pred_region
          _
        $region28: #{tpu_custom_call.1} parent=11 // pred_fallthru
          _
      $region12: #{tpu_custom_call.1} parent=5 // pred_fallthru
        _
      %p227 = scmp.lt.s32.totalorder %s16, 2
      // Predicated region
      $region29: #{tpu_custom_call.1} parent=5 // pred_check
        %p228 = pneg %p227
      $region30: #{tpu_custom_call.1} parent=5 // pred_check_branch
        %230 = sbr.rel (%p228) target = $region32
      $region31: #{tpu_custom_call.1} parent=5 // pred_region
        // Predicated region
        $region33: #{tpu_custom_call.1} parent=31 // pred_check
          %p231 = pneg %p50
        $region34: #{tpu_custom_call.1} parent=31 // pred_check_branch
          %233 = sbr.rel (%p231) target = $region36
        $region35: #{tpu_custom_call.1} parent=31 // pred_region
          %s234 = smul.u32 16, %s24
          %s235 = ssub.s32 17, %s234
          %p236 = scmp.lt.s32.totalorder %s235, 16
          %s237 = scalar_select %p236, %s235, 16
          %s238 = smul.u32 64, %s237
          %s239 = smul.u32 %s238, 3
          %p240 = scmp.lt.s32.totalorder %s23, 1
          %s241 = scalar_select %p240, %s23, 1
          %p242 = scmp.lt.s32.totalorder %s234, 16
          %s243 = scalar_select %p242, %s234, 16
          %s244 = smul.addr %s243, 3
          %s245 = smul.addr %s241, 51
          %s246 = sadd.s32 %s244, %s245
          %s247 = smul.addr %s246, 4
          %s248 = scalar_lea.vmem %s0, %s247
          %s249 = smul.u32 16, %s24
          %s250 = ssub.s32 17, %s249
          %p251 = scmp.lt.s32.totalorder %s250, 16
          %s252 = scalar_select %p251, %s250, 16
          %s253 = smul.u32 64, %s252
          %s254 = smul.u32 %s253, 3
        $region36: #{tpu_custom_call.1} parent=31 // pred_fallthru
          _
        // Predicated region
        $region37: #{tpu_custom_call.1} parent=31 // pred_check
          %p255 = pneg %p82
        $region38: #{tpu_custom_call.1} parent=31 // pred_check_branch
          %257 = sbr.rel (%p255) target = $region40
        $region39: #{tpu_custom_call.1} parent=31 // pred_region
          %s258 = sadd.s32 %s24, 1
          %s259 = smul.u32 %s258, 16
          %p260 = scmp.lt.s32.totalorder %s23, 1
          %s261 = scalar_select %p260, %s23, 1
          %p262 = scmp.lt.s32.totalorder %s259, 16
          %s263 = scalar_select %p262, %s259, 16
          %s264 = smul.addr %s263, 3
          %s265 = smul.addr %s261, 51
          %s266 = sadd.s32 %s264, %s265
          %s267 = smul.addr %s266, 4
          %s268 = scalar_lea.vmem %s1, %s267
          %s269 = sadd.s32 %s24, 1
          %s270 = smul.u32 %s269, 16
        $region40: #{tpu_custom_call.1} parent=31 // pred_fallthru
          _
      $region32: #{tpu_custom_call.1} parent=5 // pred_fallthru
        _
      %p271 = scmp.le.s32.totalorder 1, %s16
      %p272 = scmp.lt.s32.totalorder %s16, 3
      %p273 = pnand %p271, %p272
      %p274 = pneg %p273
      // Predicated region
      $region41: #{tpu_custom_call.1} parent=5 // pred_check
        _
      $region42: #{tpu_custom_call.1} parent=5 // pred_check_branch
        %276 = sbr.rel (%p273) target = $region44
      $region43: #{tpu_custom_call.1} parent=5 // pred_region
        %s277 = ssub.s32 %s16, 1
        %s278 = smul.u32 16, %s26
        %s279 = ssub.s32 17, %s278
        %p280 = scmp.lt.s32.totalorder %s279, 16
        %s281 = scalar_select %p280, %s279, 16
        %s282 = smul.u32 64, %s281
        %s283 = smul.u32 %s282, 3
        %p284 = scmp.lt.s32.totalorder %s25, 1
        %s285 = scalar_select %p284, %s25, 1
        %p286 = scmp.lt.s32.totalorder %s278, 16
        %s287 = scalar_select %p286, %s278, 16
        %s288 = smul.addr %s287, 3
        %s289 = smul.addr %s285, 51
        %s290 = sadd.s32 %s288, %s289
        %s291 = smul.addr %s290, 4
        %s292 = scalar_lea.vmem %s0, %s291
        %p293 = pneg %p56
        %p294 = pneg %p53
        %s295 = sadd.s32 %s26, 1
        %s296 = smul.u32 %s295, 16
        %p297 = scmp.lt.s32.totalorder %s25, 1
        %s298 = scalar_select %p297, %s25, 1
        %p299 = scmp.lt.s32.totalorder %s296, 16
        %s300 = scalar_select %p299, %s296, 16
        %s301 = smul.addr %s300, 3
        %s302 = smul.addr %s298, 51
        %s303 = sadd.s32 %s301, %s302
        %s304 = smul.addr %s303, 4
        %s305 = scalar_lea.vmem %s1, %s304
        %p306 = pneg %p88
        %p307 = pneg %p85
        %p308 = pneg %p109
        %p309 = pneg %p106
        %p310 = pneg %p130
        %p311 = pneg %p127
        %p312 = pneg %p151
        %p313 = pneg %p148
        %p314 = pneg %p172
        %p315 = pneg %p169
        %p316 = pneg %p200
        %p317 = pneg %p197
        %s318 = sand.u32 %s187, 1
        %s319 = scalar_lea.sflag [#allocation4], %s318
        %s320 = sand.u32 %s187, 1
        %s321 = smul.addr %s320, 32
        %s322 = scalar_lea.vmem [#allocation3], %s321
        %s323 = smul.u32 16, %s26
        %s324 = ssub.s32 17, %s323
        %p325 = scmp.lt.s32.totalorder %s324, 16
        %s326 = scalar_select %p325, %s324, 16
        %s327 = smul.u32 64, %s326
        %s328 = smul.u32 %s327, 3
        %p329 = scmp.lt.s32.totalorder %s25, 1
        %s330 = scalar_select %p329, %s25, 1
        %p331 = scmp.lt.s32.totalorder %s323, 16
        %s332 = scalar_select %p331, %s323, 16
        %s333 = smul.addr %s332, 3
        %s334 = smul.addr %s330, 51
        %s335 = sadd.s32 %s333, %s334
        %s336 = smul.addr %s335, 4
        %s337 = scalar_lea.vmem %s0, %s336
        %s338 = smul.u32 16, %s26
        %s339 = ssub.s32 17, %s338
        %p340 = scmp.lt.s32.totalorder %s339, 16
        %s341 = scalar_select %p340, %s339, 16
        %s342 = smul.u32 64, %s341
        %s343 = smul.u32 %s342, 3
        %s344 = sadd.s32 %s26, 1
        %s345 = smul.u32 %s344, 16
        %p346 = scmp.lt.s32.totalorder %s25, 1
        %s347 = scalar_select %p346, %s25, 1
        %p348 = scmp.lt.s32.totalorder %s345, 16
        %s349 = scalar_select %p348, %s345, 16
        %s350 = smul.addr %s349, 3
        %s351 = smul.addr %s347, 51
        %s352 = sadd.s32 %s350, %s351
        %s353 = smul.addr %s352, 4
        %s354 = scalar_lea.vmem %s1, %s353
        %s355 = sadd.s32 %s26, 1
        %s356 = smul.u32 %s355, 16
        %s357 = smul.u32 2, %s26
        %v359 = vld [vmem:[%s337] sm:$0xf]
        %v360 = vld [vmem:[%s337 + $0x4] sm:$0xf]
        %v361 = vld [vmem:[%s337 + $0x8] sm:$0x1]
        %v362 = vld [vmem:[%s337 + $0xc] sm:$0xf]
        %v363 = vld [vmem:[%s337 + $0x10] sm:$0xf]
        %v364 = vld [vmem:[%s337 + $0x14] sm:$0x1]
        %v365 = vld [vmem:[%s337 + $0x18] sm:$0xf]
        %v366 = vld [vmem:[%s337 + $0x1c] sm:$0xf]
        %v367 = vld [vmem:[%s337 + $0x20] sm:$0x1]
        %v368 = vld [vmem:[%s337 + $0x24] sm:$0xf]
        %v369 = vld [vmem:[%s337 + $0x28] sm:$0xf]
        %v370 = vld [vmem:[%s337 + $0x2c] sm:$0x1]
        %v371 = vld [vmem:[%s337 + $0x30] sm:$0xf]
        %v372 = vld [vmem:[%s337 + $0x34] sm:$0xf]
        %v373 = vld [vmem:[%s337 + $0x38] sm:$0x1]
        %v374 = vld [vmem:[%s337 + $0x3c] sm:$0xf]
        %v375 = vld [vmem:[%s337 + $0x40] sm:$0xf]
        %v376 = vld [vmem:[%s337 + $0x44] sm:$0x1]
        %v377 = vld [vmem:[%s337 + $0x48] sm:$0xf]
        %v378 = vld [vmem:[%s337 + $0x4c] sm:$0xf]
        %v379 = vld [vmem:[%s337 + $0x50] sm:$0x1]
        %v380 = vld [vmem:[%s337 + $0x54] sm:$0xf]
        %v381 = vld [vmem:[%s337 + $0x58] sm:$0xf]
        %v382 = vld [vmem:[%s337 + $0x5c] sm:$0x1]
        %v383 = vld [vmem:[%s337 + $0x60] sm:$0xf]
        %v384 = vld [vmem:[%s337 + $0x64] sm:$0xf]
        %v385 = vld [vmem:[%s337 + $0x68] sm:$0x1]
        %v386 = vld [vmem:[%s337 + $0x6c] sm:$0xf]
        %v387 = vld [vmem:[%s337 + $0x70] sm:$0xf]
        %v388 = vld [vmem:[%s337 + $0x74] sm:$0x1]
        %v389 = vld [vmem:[%s337 + $0x78] sm:$0xf]
        %v390 = vld [vmem:[%s337 + $0x7c] sm:$0xf]
        %v391 = vld [vmem:[%s337 + $0x80] sm:$0x1]
        %v392 = vld [vmem:[%s337 + $0x84] sm:$0xf]
        %v393 = vld [vmem:[%s337 + $0x88] sm:$0xf]
        %v394 = vld [vmem:[%s337 + $0x8c] sm:$0x1]
        %v395 = vld [vmem:[%s337 + $0x90] sm:$0xf]
        %v396 = vld [vmem:[%s337 + $0x94] sm:$0xf]
        %v397 = vld [vmem:[%s337 + $0x98] sm:$0x1]
        %v398 = vld [vmem:[%s337 + $0x9c] sm:$0xf]
        %v399 = vld [vmem:[%s337 + $0xa0] sm:$0xf]
        %v400 = vld [vmem:[%s337 + $0xa4] sm:$0x1]
        %v401 = vld [vmem:[%s337 + $0xa8] sm:$0xf]
        %v402 = vld [vmem:[%s337 + $0xac] sm:$0xf]
        %v403 = vld [vmem:[%s337 + $0xb0] sm:$0x1]
        %v404 = vld [vmem:[%s337 + $0xb4] sm:$0xf]
        %v405 = vld [vmem:[%s337 + $0xb8] sm:$0xf]
        %v406 = vld [vmem:[%s337 + $0xbc] sm:$0x1]
        %v407 = vld [vmem:[%s354] sm:$0xf]
        %v408 = vld [vmem:[%s354 + $0x4] sm:$0xf]
        %v409 = vld [vmem:[%s354 + $0x8] sm:$0x1]
        %vm410 = vsmask.f32 3328
        %vm411 = vsmask.f32 7440
        %vm412 = vmor %vm410, %vm411
        %v414 = vshrl.u32 %v359, 16
        %v416 = vrot.slane %v414, 4
        %v417 = vshll.u32 %v359, 16
        %v419 = vrot.slane %v417, 5
        %v420 = vor.u32 %v416, %v419
        %v421 = vrot.slane %v420, 4
        %v423 = vshll.u32 %v360, 16
        %v425 = vrot.slane %v423, 5
        %v426 = vsel %vm412, %v421, %v425
        %v427 = vshrl.u32 %v360, 16
        %v429 = vrot.slane %v427, 4
        %v430 = vor.u32 %v429, %v425
        %v431 = vrot.slane %v430, 4
        %v433 = vshll.u32 %v361, 16
        %v435 = vrot.slane %v433, 5
        %v436 = vsel %vm412, %v431, %v435
        %v438 = vshrl.u32 %v362, 16
        %v440 = vrot.slane %v438, 4
        %v441 = vshll.u32 %v362, 16
        %v443 = vrot.slane %v441, 5
        %v444 = vor.u32 %v440, %v443
        %v445 = vrot.slane %v444, 4
        %v447 = vshll.u32 %v363, 16
        %v449 = vrot.slane %v447, 5
        %v450 = vsel %vm412, %v445, %v449
        %v451 = vshrl.u32 %v363, 16
        %v453 = vrot.slane %v451, 4
        %v454 = vor.u32 %v453, %v449
        %v455 = vrot.slane %v454, 4
        %v457 = vshll.u32 %v364, 16
        %v459 = vrot.slane %v457, 5
        %v460 = vsel %vm412, %v455, %v459
        %v462 = vshrl.u32 %v365, 16
        %v464 = vrot.slane %v462, 4
        %v465 = vshll.u32 %v365, 16
        %v467 = vrot.slane %v465, 5
        %v468 = vor.u32 %v464, %v467
        %v469 = vrot.slane %v468, 4
        %v471 = vshll.u32 %v366, 16
        %v473 = vrot.slane %v471, 5
        %v474 = vsel %vm412, %v469, %v473
        %v475 = vshrl.u32 %v366, 16
        %v477 = vrot.slane %v475, 4
        %v478 = vor.u32 %v477, %v473
        %v479 = vrot.slane %v478, 4
        %v481 = vshll.u32 %v367, 16
        %v483 = vrot.slane %v481, 5
        %v484 = vsel %vm412, %v479, %v483
        %v486 = vshrl.u32 %v368, 16
        %v488 = vrot.slane %v486, 4
        %v489 = vshll.u32 %v368, 16
        %v491 = vrot.slane %v489, 5
        %v492 = vor.u32 %v488, %v491
        %v493 = vrot.slane %v492, 4
        %v495 = vshll.u32 %v369, 16
        %v497 = vrot.slane %v495, 5
        %v498 = vsel %vm412, %v493, %v497
        %v499 = vshrl.u32 %v369, 16
        %v501 = vrot.slane %v499, 4
        %v502 = vor.u32 %v501, %v497
        %v503 = vrot.slane %v502, 4
        %v505 = vshll.u32 %v370, 16
        %v507 = vrot.slane %v505, 5
        %v508 = vsel %vm412, %v503, %v507
        %v510 = vshrl.u32 %v371, 16
        %v512 = vrot.slane %v510, 4
        %v513 = vshll.u32 %v371, 16
        %v515 = vrot.slane %v513, 5
        %v516 = vor.u32 %v512, %v515
        %v517 = vrot.slane %v516, 4
        %v519 = vshll.u32 %v372, 16
        %v521 = vrot.slane %v519, 5
        %v522 = vsel %vm412, %v517, %v521
        %v523 = vshrl.u32 %v372, 16
        %v525 = vrot.slane %v523, 4
        %v526 = vor.u32 %v525, %v521
        %v527 = vrot.slane %v526, 4
        %v529 = vshll.u32 %v373, 16
        %v531 = vrot.slane %v529, 5
        %v532 = vsel %vm412, %v527, %v531
        %v534 = vshrl.u32 %v374, 16
        %v536 = vrot.slane %v534, 4
        %v537 = vshll.u32 %v374, 16
        %v539 = vrot.slane %v537, 5
        %v540 = vor.u32 %v536, %v539
        %v541 = vrot.slane %v540, 4
        %v543 = vshll.u32 %v375, 16
        %v545 = vrot.slane %v543, 5
        %v546 = vsel %vm412, %v541, %v545
        %v547 = vshrl.u32 %v375, 16
        %v549 = vrot.slane %v547, 4
        %v550 = vor.u32 %v549, %v545
        %v551 = vrot.slane %v550, 4
        %v553 = vshll.u32 %v376, 16
        %v555 = vrot.slane %v553, 5
        %v556 = vsel %vm412, %v551, %v555
        %v558 = vshrl.u32 %v377, 16
        %v560 = vrot.slane %v558, 4
        %v561 = vshll.u32 %v377, 16
        %v563 = vrot.slane %v561, 5
        %v564 = vor.u32 %v560, %v563
        %v565 = vrot.slane %v564, 4
        %v567 = vshll.u32 %v378, 16
        %v569 = vrot.slane %v567, 5
        %v570 = vsel %vm412, %v565, %v569
        %v571 = vshrl.u32 %v378, 16
        %v573 = vrot.slane %v571, 4
        %v574 = vor.u32 %v573, %v569
        %v575 = vrot.slane %v574, 4
        %v577 = vshll.u32 %v379, 16
        %v579 = vrot.slane %v577, 5
        %v580 = vsel %vm412, %v575, %v579
        %v582 = vshrl.u32 %v380, 16
        %v584 = vrot.slane %v582, 4
        %v585 = vshll.u32 %v380, 16
        %v587 = vrot.slane %v585, 5
        %v588 = vor.u32 %v584, %v587
        %v589 = vrot.slane %v588, 4
        %v591 = vshll.u32 %v381, 16
        %v593 = vrot.slane %v591, 5
        %v594 = vsel %vm412, %v589, %v593
        %v595 = vshrl.u32 %v381, 16
        %v597 = vrot.slane %v595, 4
        %v598 = vor.u32 %v597, %v593
        %v599 = vrot.slane %v598, 4
        %v601 = vshll.u32 %v382, 16
        %v603 = vrot.slane %v601, 5
        %v604 = vsel %vm412, %v599, %v603
        %v606 = vshrl.u32 %v383, 16
        %v608 = vrot.slane %v606, 4
        %v609 = vshll.u32 %v383, 16
        %v611 = vrot.slane %v609, 5
        %v612 = vor.u32 %v608, %v611
        %v613 = vrot.slane %v612, 4
        %v615 = vshll.u32 %v384, 16
        %v617 = vrot.slane %v615, 5
        %v618 = vsel %vm412, %v613, %v617
        %v619 = vshrl.u32 %v384, 16
        %v621 = vrot.slane %v619, 4
        %v622 = vor.u32 %v621, %v617
        %v623 = vrot.slane %v622, 4
        %v625 = vshll.u32 %v385, 16
        %v627 = vrot.slane %v625, 5
        %v628 = vsel %vm412, %v623, %v627
        %v630 = vshrl.u32 %v386, 16
        %v632 = vrot.slane %v630, 4
        %v633 = vshll.u32 %v386, 16
        %v635 = vrot.slane %v633, 5
        %v636 = vor.u32 %v632, %v635
        %v637 = vrot.slane %v636, 4
        %v639 = vshll.u32 %v387, 16
        %v641 = vrot.slane %v639, 5
        %v642 = vsel %vm412, %v637, %v641
        %v643 = vshrl.u32 %v387, 16
        %v645 = vrot.slane %v643, 4
        %v646 = vor.u32 %v645, %v641
        %v647 = vrot.slane %v646, 4
        %v649 = vshll.u32 %v388, 16
        %v651 = vrot.slane %v649, 5
        %v652 = vsel %vm412, %v647, %v651
        %v654 = vshrl.u32 %v389, 16
        %v656 = vrot.slane %v654, 4
        %v657 = vshll.u32 %v389, 16
        %v659 = vrot.slane %v657, 5
        %v660 = vor.u32 %v656, %v659
        %v661 = vrot.slane %v660, 4
        %v663 = vshll.u32 %v390, 16
        %v665 = vrot.slane %v663, 5
        %v666 = vsel %vm412, %v661, %v665
        %v667 = vshrl.u32 %v390, 16
        %v669 = vrot.slane %v667, 4
        %v670 = vor.u32 %v669, %v665
        %v671 = vrot.slane %v670, 4
        %v673 = vshll.u32 %v391, 16
        %v675 = vrot.slane %v673, 5
        %v676 = vsel %vm412, %v671, %v675
        %v678 = vshrl.u32 %v392, 16
        %v680 = vrot.slane %v678, 4
        %v681 = vshll.u32 %v392, 16
        %v683 = vrot.slane %v681, 5
        %v684 = vor.u32 %v680, %v683
        %v685 = vrot.slane %v684, 4
        %v687 = vshll.u32 %v393, 16
        %v689 = vrot.slane %v687, 5
        %v690 = vsel %vm412, %v685, %v689
        %v691 = vshrl.u32 %v393, 16
        %v693 = vrot.slane %v691, 4
        %v694 = vor.u32 %v693, %v689
        %v695 = vrot.slane %v694, 4
        %v697 = vshll.u32 %v394, 16
        %v699 = vrot.slane %v697, 5
        %v700 = vsel %vm412, %v695, %v699
        %v702 = vshrl.u32 %v395, 16
        %v704 = vrot.slane %v702, 4
        %v705 = vshll.u32 %v395, 16
        %v707 = vrot.slane %v705, 5
        %v708 = vor.u32 %v704, %v707
        %v709 = vrot.slane %v708, 4
        %v711 = vshll.u32 %v396, 16
        %v713 = vrot.slane %v711, 5
        %v714 = vsel %vm412, %v709, %v713
        %v715 = vshrl.u32 %v396, 16
        %v717 = vrot.slane %v715, 4
        %v718 = vor.u32 %v717, %v713
        %v719 = vrot.slane %v718, 4
        %v721 = vshll.u32 %v397, 16
        %v723 = vrot.slane %v721, 5
        %v724 = vsel %vm412, %v719, %v723
        %v726 = vshrl.u32 %v398, 16
        %v728 = vrot.slane %v726, 4
        %v729 = vshll.u32 %v398, 16
        %v731 = vrot.slane %v729, 5
        %v732 = vor.u32 %v728, %v731
        %v733 = vrot.slane %v732, 4
        %v735 = vshll.u32 %v399, 16
        %v737 = vrot.slane %v735, 5
        %v738 = vsel %vm412, %v733, %v737
        %v739 = vshrl.u32 %v399, 16
        %v741 = vrot.slane %v739, 4
        %v742 = vor.u32 %v741, %v737
        %v743 = vrot.slane %v742, 4
        %v745 = vshll.u32 %v400, 16
        %v747 = vrot.slane %v745, 5
        %v748 = vsel %vm412, %v743, %v747
        %v750 = vshrl.u32 %v401, 16
        %v752 = vrot.slane %v750, 4
        %v753 = vshll.u32 %v401, 16
        %v755 = vrot.slane %v753, 5
        %v756 = vor.u32 %v752, %v755
        %v757 = vrot.slane %v756, 4
        %v759 = vshll.u32 %v402, 16
        %v761 = vrot.slane %v759, 5
        %v762 = vsel %vm412, %v757, %v761
        %v763 = vshrl.u32 %v402, 16
        %v765 = vrot.slane %v763, 4
        %v766 = vor.u32 %v765, %v761
        %v767 = vrot.slane %v766, 4
        %v769 = vshll.u32 %v403, 16
        %v771 = vrot.slane %v769, 5
        %v772 = vsel %vm412, %v767, %v771
        %v774 = vshrl.u32 %v404, 16
        %v776 = vrot.slane %v774, 4
        %v777 = vshll.u32 %v404, 16
        %v779 = vrot.slane %v777, 5
        %v780 = vor.u32 %v776, %v779
        %v781 = vrot.slane %v780, 4
        %v783 = vshll.u32 %v405, 16
        %v785 = vrot.slane %v783, 5
        %v786 = vsel %vm412, %v781, %v785
        %v787 = vshrl.u32 %v405, 16
        %v789 = vrot.slane %v787, 4
        %v790 = vor.u32 %v789, %v785
        %v791 = vrot.slane %v790, 4
        %v793 = vshll.u32 %v406, 16
        %v795 = vrot.slane %v793, 5
        %v796 = vsel %vm412, %v791, %v795
        %v830 = vshrl.u32 %v407, 16
        %v832 = vrot.slane %v830, 4
        %v833 = vshll.u32 %v407, 16
        %v835 = vrot.slane %v833, 5
        %v836 = vor.u32 %v832, %v835
        %v837 = vrot.slane %v836, 4
        %v839 = vshll.u32 %v408, 16
        %v841 = vrot.slane %v839, 5
        %v842 = vsel %vm412, %v837, %v841
        %v843 = vshrl.u32 %v408, 16
        %v845 = vrot.slane %v843, 4
        %v846 = vor.u32 %v845, %v841
        %v847 = vrot.slane %v846, 4
        %v849 = vshll.u32 %v409, 16
        %v851 = vrot.slane %v849, 5
        %v852 = vsel %vm412, %v847, %v851
        %v855 = vunpack.c.l.bf16 %v359
        %v856 = vunpack.c.l.bf16 %v360
        %v857 = vunpack.c.l.bf16 %v362
        %v858 = vunpack.c.l.bf16 %v363
        %v859 = vunpack.c.l.bf16 %v365
        %v860 = vunpack.c.l.bf16 %v366
        %v861 = vunpack.c.l.bf16 %v368
        %v862 = vunpack.c.l.bf16 %v369
        %v863 = vunpack.c.l.bf16 %v371
        %v864 = vunpack.c.l.bf16 %v372
        %v865 = vunpack.c.l.bf16 %v374
        %v866 = vunpack.c.l.bf16 %v375
        %v867 = vunpack.c.l.bf16 %v377
        %v868 = vunpack.c.l.bf16 %v378
        %v869 = vunpack.c.l.bf16 %v380
        %v870 = vunpack.c.l.bf16 %v381
        %v871 = vunpack.c.l.bf16 %v383
        %v872 = vunpack.c.l.bf16 %v384
        %v873 = vunpack.c.l.bf16 %v386
        %v874 = vunpack.c.l.bf16 %v387
        %v875 = vunpack.c.l.bf16 %v389
        %v876 = vunpack.c.l.bf16 %v390
        %v877 = vunpack.c.l.bf16 %v392
        %v878 = vunpack.c.l.bf16 %v393
        %v879 = vunpack.c.l.bf16 %v395
        %v880 = vunpack.c.l.bf16 %v396
        %v881 = vunpack.c.l.bf16 %v398
        %v882 = vunpack.c.l.bf16 %v399
        %v883 = vunpack.c.l.bf16 %v401
        %v884 = vunpack.c.l.bf16 %v402
        %v885 = vunpack.c.l.bf16 %v404
        %v886 = vunpack.c.l.bf16 %v405
        %v887 = vunpack.c.l.bf16 %v426
        %v888 = vunpack.c.l.bf16 %v436
        %v889 = vunpack.c.l.bf16 %v450
        %v890 = vunpack.c.l.bf16 %v460
        %v891 = vunpack.c.l.bf16 %v474
        %v892 = vunpack.c.l.bf16 %v484
        %v893 = vunpack.c.l.bf16 %v498
        %v894 = vunpack.c.l.bf16 %v508
        %v895 = vunpack.c.l.bf16 %v522
        %v896 = vunpack.c.l.bf16 %v532
        %v897 = vunpack.c.l.bf16 %v546
        %v898 = vunpack.c.l.bf16 %v556
        %v899 = vunpack.c.l.bf16 %v570
        %v900 = vunpack.c.l.bf16 %v580
        %v901 = vunpack.c.l.bf16 %v594
        %v902 = vunpack.c.l.bf16 %v604
        %v903 = vunpack.c.l.bf16 %v618
        %v904 = vunpack.c.l.bf16 %v628
        %v905 = vunpack.c.l.bf16 %v642
        %v906 = vunpack.c.l.bf16 %v652
        %v907 = vunpack.c.l.bf16 %v666
        %v908 = vunpack.c.l.bf16 %v676
        %v909 = vunpack.c.l.bf16 %v690
        %v910 = vunpack.c.l.bf16 %v700
        %v911 = vunpack.c.l.bf16 %v714
        %v912 = vunpack.c.l.bf16 %v724
        %v913 = vunpack.c.l.bf16 %v738
        %v914 = vunpack.c.l.bf16 %v748
        %v915 = vunpack.c.l.bf16 %v762
        %v916 = vunpack.c.l.bf16 %v772
        %v917 = vunpack.c.l.bf16 %v786
        %v918 = vunpack.c.l.bf16 %v796
        %v919 = vunpack.c.l.bf16 %v407
        %v920 = vunpack.c.l.bf16 %v408
        %v921 = vunpack.c.l.bf16 %v842
        %v922 = vunpack.c.l.bf16 %v852
        %v923 = vlaneseq
        %v924 = vshrl.u32 %v923, 7
        %v925 = vadd.s32 %v924, 8
        %v926 = vadd.s32 %v924, 16
        %v927 = vadd.s32 %v924, 24
        %v928 = vadd.s32 %v924, 32
        %v929 = vadd.s32 %v924, 40
        %v930 = vadd.s32 %v924, 48
        %v931 = vadd.s32 %v924, 56
        %v932 = vadd.s32 %v924, 64
        %v933 = vadd.s32 %v924, 72
        %v934 = vadd.s32 %v924, 80
        %v935 = vadd.s32 %v924, 88
        %v936 = vadd.s32 %v924, 96
        %v937 = vadd.s32 %v924, 104
        %v938 = vadd.s32 %v924, 112
        %v939 = vadd.s32 %v924, 120
        %v940 = vadd.s32 %v924, 128
        %v941 = vadd.s32 %v924, 136
        %v942 = vadd.s32 %v924, 144
        %v943 = vadd.s32 %v924, 152
        %v944 = vadd.s32 %v924, 160
        %v945 = vadd.s32 %v924, 168
        %v946 = vadd.s32 %v924, 176
        %v947 = vadd.s32 %v924, 184
        %v948 = vadd.s32 %v924, 192
        %v949 = vadd.s32 %v924, 200
        %v950 = vadd.s32 %v924, 208
        %v951 = vadd.s32 %v924, 216
        %v952 = vadd.s32 %v924, 224
        %v953 = vadd.s32 %v924, 232
        %v954 = vadd.s32 %v924, 240
        %v955 = vadd.s32 %v924, 248
        %vm956 = vcmp.lt.s32.totalorder %v924, 0
        %v957 = vsub.s32 0, %v924
        %v958 = vsel %vm956, %v957, %v924
        %v959 = vshrl.u32 %v958, 4
        %v960 = vand.u32 %v958, 15
        %v961 = vsub.s32 0, %v960
        %v962 = vsel %vm956, %v961, %v960
        %vm963 = vcmp.lt.s32.totalorder %v925, 0
        %v964 = vsub.s32 0, %v925
        %v965 = vsel %vm963, %v964, %v925
        %v966 = vshrl.u32 %v965, 4
        %v967 = vand.u32 %v965, 15
        %v968 = vsub.s32 0, %v967
        %v969 = vsel %vm963, %v968, %v967
        %vm970 = vcmp.lt.s32.totalorder %v926, 0
        %v971 = vsub.s32 0, %v926
        %v972 = vsel %vm970, %v971, %v926
        %v973 = vshrl.u32 %v972, 4
        %v974 = vand.u32 %v972, 15
        %v975 = vsub.s32 0, %v974
        %v976 = vsel %vm970, %v975, %v974
        %vm977 = vcmp.lt.s32.totalorder %v927, 0
        %v978 = vsub.s32 0, %v927
        %v979 = vsel %vm977, %v978, %v927
        %v980 = vshrl.u32 %v979, 4
        %v981 = vand.u32 %v979, 15
        %v982 = vsub.s32 0, %v981
        %v983 = vsel %vm977, %v982, %v981
        %vm984 = vcmp.lt.s32.totalorder %v928, 0
        %v985 = vsub.s32 0, %v928
        %v986 = vsel %vm984, %v985, %v928
        %v987 = vshrl.u32 %v986, 4
        %v988 = vand.u32 %v986, 15
        %v989 = vsub.s32 0, %v988
        %v990 = vsel %vm984, %v989, %v988
        %vm991 = vcmp.lt.s32.totalorder %v929, 0
        %v992 = vsub.s32 0, %v929
        %v993 = vsel %vm991, %v992, %v929
        %v994 = vshrl.u32 %v993, 4
        %v995 = vand.u32 %v993, 15
        %v996 = vsub.s32 0, %v995
        %v997 = vsel %vm991, %v996, %v995
        %vm998 = vcmp.lt.s32.totalorder %v930, 0
        %v999 = vsub.s32 0, %v930
        %v1000 = vsel %vm998, %v999, %v930
        %v1001 = vshrl.u32 %v1000, 4
        %v1002 = vand.u32 %v1000, 15
        %v1003 = vsub.s32 0, %v1002
        %v1004 = vsel %vm998, %v1003, %v1002
        %vm1005 = vcmp.lt.s32.totalorder %v931, 0
        %v1006 = vsub.s32 0, %v931
        %v1007 = vsel %vm1005, %v1006, %v931
        %v1008 = vshrl.u32 %v1007, 4
        %v1009 = vand.u32 %v1007, 15
        %v1010 = vsub.s32 0, %v1009
        %v1011 = vsel %vm1005, %v1010, %v1009
        %vm1012 = vcmp.lt.s32.totalorder %v932, 0
        %v1013 = vsub.s32 0, %v932
        %v1014 = vsel %vm1012, %v1013, %v932
        %v1015 = vshrl.u32 %v1014, 4
        %v1016 = vand.u32 %v1014, 15
        %v1017 = vsub.s32 0, %v1016
        %v1018 = vsel %vm1012, %v1017, %v1016
        %vm1019 = vcmp.lt.s32.totalorder %v933, 0
        %v1020 = vsub.s32 0, %v933
        %v1021 = vsel %vm1019, %v1020, %v933
        %v1022 = vshrl.u32 %v1021, 4
        %v1023 = vand.u32 %v1021, 15
        %v1024 = vsub.s32 0, %v1023
        %v1025 = vsel %vm1019, %v1024, %v1023
        %vm1026 = vcmp.lt.s32.totalorder %v934, 0
        %v1027 = vsub.s32 0, %v934
        %v1028 = vsel %vm1026, %v1027, %v934
        %v1029 = vshrl.u32 %v1028, 4
        %v1030 = vand.u32 %v1028, 15
        %v1031 = vsub.s32 0, %v1030
        %v1032 = vsel %vm1026, %v1031, %v1030
        %vm1033 = vcmp.lt.s32.totalorder %v935, 0
        %v1034 = vsub.s32 0, %v935
        %v1035 = vsel %vm1033, %v1034, %v935
        %v1036 = vshrl.u32 %v1035, 4
        %v1037 = vand.u32 %v1035, 15
        %v1038 = vsub.s32 0, %v1037
        %v1039 = vsel %vm1033, %v1038, %v1037
        %vm1040 = vcmp.lt.s32.totalorder %v936, 0
        %v1041 = vsub.s32 0, %v936
        %v1042 = vsel %vm1040, %v1041, %v936
        %v1043 = vshrl.u32 %v1042, 4
        %v1044 = vand.u32 %v1042, 15
        %v1045 = vsub.s32 0, %v1044
        %v1046 = vsel %vm1040, %v1045, %v1044
        %vm1047 = vcmp.lt.s32.totalorder %v937, 0
        %v1048 = vsub.s32 0, %v937
        %v1049 = vsel %vm1047, %v1048, %v937
        %v1050 = vshrl.u32 %v1049, 4
        %v1051 = vand.u32 %v1049, 15
        %v1052 = vsub.s32 0, %v1051
        %v1053 = vsel %vm1047, %v1052, %v1051
        %vm1054 = vcmp.lt.s32.totalorder %v938, 0
        %v1055 = vsub.s32 0, %v938
        %v1056 = vsel %vm1054, %v1055, %v938
        %v1057 = vshrl.u32 %v1056, 4
        %v1058 = vand.u32 %v1056, 15
        %v1059 = vsub.s32 0, %v1058
        %v1060 = vsel %vm1054, %v1059, %v1058
        %vm1061 = vcmp.lt.s32.totalorder %v939, 0
        %v1062 = vsub.s32 0, %v939
        %v1063 = vsel %vm1061, %v1062, %v939
        %v1064 = vshrl.u32 %v1063, 4
        %v1065 = vand.u32 %v1063, 15
        %v1066 = vsub.s32 0, %v1065
        %v1067 = vsel %vm1061, %v1066, %v1065
        %vm1068 = vcmp.lt.s32.totalorder %v940, 0
        %v1069 = vsub.s32 0, %v940
        %v1070 = vsel %vm1068, %v1069, %v940
        %v1071 = vshrl.u32 %v1070, 4
        %v1072 = vand.u32 %v1070, 15
        %v1073 = vsub.s32 0, %v1072
        %v1074 = vsel %vm1068, %v1073, %v1072
        %vm1075 = vcmp.lt.s32.totalorder %v941, 0
        %v1076 = vsub.s32 0, %v941
        %v1077 = vsel %vm1075, %v1076, %v941
        %v1078 = vshrl.u32 %v1077, 4
        %v1079 = vand.u32 %v1077, 15
        %v1080 = vsub.s32 0, %v1079
        %v1081 = vsel %vm1075, %v1080, %v1079
        %vm1082 = vcmp.lt.s32.totalorder %v942, 0
        %v1083 = vsub.s32 0, %v942
        %v1084 = vsel %vm1082, %v1083, %v942
        %v1085 = vshrl.u32 %v1084, 4
        %v1086 = vand.u32 %v1084, 15
        %v1087 = vsub.s32 0, %v1086
        %v1088 = vsel %vm1082, %v1087, %v1086
        %vm1089 = vcmp.lt.s32.totalorder %v943, 0
        %v1090 = vsub.s32 0, %v943
        %v1091 = vsel %vm1089, %v1090, %v943
        %v1092 = vshrl.u32 %v1091, 4
        %v1093 = vand.u32 %v1091, 15
        %v1094 = vsub.s32 0, %v1093
        %v1095 = vsel %vm1089, %v1094, %v1093
        %vm1096 = vcmp.lt.s32.totalorder %v944, 0
        %v1097 = vsub.s32 0, %v944
        %v1098 = vsel %vm1096, %v1097, %v944
        %v1099 = vshrl.u32 %v1098, 4
        %v1100 = vand.u32 %v1098, 15
        %v1101 = vsub.s32 0, %v1100
        %v1102 = vsel %vm1096, %v1101, %v1100
        %vm1103 = vcmp.lt.s32.totalorder %v945, 0
        %v1104 = vsub.s32 0, %v945
        %v1105 = vsel %vm1103, %v1104, %v945
        %v1106 = vshrl.u32 %v1105, 4
        %v1107 = vand.u32 %v1105, 15
        %v1108 = vsub.s32 0, %v1107
        %v1109 = vsel %vm1103, %v1108, %v1107
        %vm1110 = vcmp.lt.s32.totalorder %v946, 0
        %v1111 = vsub.s32 0, %v946
        %v1112 = vsel %vm1110, %v1111, %v946
        %v1113 = vshrl.u32 %v1112, 4
        %v1114 = vand.u32 %v1112, 15
        %v1115 = vsub.s32 0, %v1114
        %v1116 = vsel %vm1110, %v1115, %v1114
        %vm1117 = vcmp.lt.s32.totalorder %v947, 0
        %v1118 = vsub.s32 0, %v947
        %v1119 = vsel %vm1117, %v1118, %v947
        %v1120 = vshrl.u32 %v1119, 4
        %v1121 = vand.u32 %v1119, 15
        %v1122 = vsub.s32 0, %v1121
        %v1123 = vsel %vm1117, %v1122, %v1121
        %vm1124 = vcmp.lt.s32.totalorder %v948, 0
        %v1125 = vsub.s32 0, %v948
        %v1126 = vsel %vm1124, %v1125, %v948
        %v1127 = vshrl.u32 %v1126, 4
        %v1128 = vand.u32 %v1126, 15
        %v1129 = vsub.s32 0, %v1128
        %v1130 = vsel %vm1124, %v1129, %v1128
        %vm1131 = vcmp.lt.s32.totalorder %v949, 0
        %v1132 = vsub.s32 0, %v949
        %v1133 = vsel %vm1131, %v1132, %v949
        %v1134 = vshrl.u32 %v1133, 4
        %v1135 = vand.u32 %v1133, 15
        %v1136 = vsub.s32 0, %v1135
        %v1137 = vsel %vm1131, %v1136, %v1135
        %vm1138 = vcmp.lt.s32.totalorder %v950, 0
        %v1139 = vsub.s32 0, %v950
        %v1140 = vsel %vm1138, %v1139, %v950
        %v1141 = vshrl.u32 %v1140, 4
        %v1142 = vand.u32 %v1140, 15
        %v1143 = vsub.s32 0, %v1142
        %v1144 = vsel %vm1138, %v1143, %v1142
        %vm1145 = vcmp.lt.s32.totalorder %v951, 0
        %v1146 = vsub.s32 0, %v951
        %v1147 = vsel %vm1145, %v1146, %v951
        %v1148 = vshrl.u32 %v1147, 4
        %v1149 = vand.u32 %v1147, 15
        %v1150 = vsub.s32 0, %v1149
        %v1151 = vsel %vm1145, %v1150, %v1149
        %vm1152 = vcmp.lt.s32.totalorder %v952, 0
        %v1153 = vsub.s32 0, %v952
        %v1154 = vsel %vm1152, %v1153, %v952
        %v1155 = vshrl.u32 %v1154, 4
        %v1156 = vand.u32 %v1154, 15
        %v1157 = vsub.s32 0, %v1156
        %v1158 = vsel %vm1152, %v1157, %v1156
        %vm1159 = vcmp.lt.s32.totalorder %v953, 0
        %v1160 = vsub.s32 0, %v953
        %v1161 = vsel %vm1159, %v1160, %v953
        %v1162 = vshrl.u32 %v1161, 4
        %v1163 = vand.u32 %v1161, 15
        %v1164 = vsub.s32 0, %v1163
        %v1165 = vsel %vm1159, %v1164, %v1163
        %vm1166 = vcmp.lt.s32.totalorder %v954, 0
        %v1167 = vsub.s32 0, %v954
        %v1168 = vsel %vm1166, %v1167, %v954
        %v1169 = vshrl.u32 %v1168, 4
        %v1170 = vand.u32 %v1168, 15
        %v1171 = vsub.s32 0, %v1170
        %v1172 = vsel %vm1166, %v1171, %v1170
        %vm1173 = vcmp.lt.s32.totalorder %v955, 0
        %v1174 = vsub.s32 0, %v955
        %v1175 = vsel %vm1173, %v1174, %v955
        %v1176 = vshrl.u32 %v1175, 4
        %v1177 = vand.u32 %v1175, 15
        %v1178 = vsub.s32 0, %v1177
        %v1179 = vsel %vm1173, %v1178, %v1177
        %vm1180 = vcmp.ne.s32.totalorder %v962, 0
        %vm1181 = vcmp.ne.s32.totalorder %v969, 0
        %vm1182 = vcmp.ne.s32.totalorder %v976, 0
        %vm1183 = vcmp.ne.s32.totalorder %v983, 0
        %vm1184 = vcmp.ne.s32.totalorder %v990, 0
        %vm1185 = vcmp.ne.s32.totalorder %v997, 0
        %vm1186 = vcmp.ne.s32.totalorder %v1004, 0
        %vm1187 = vcmp.ne.s32.totalorder %v1011, 0
        %vm1188 = vcmp.ne.s32.totalorder %v1018, 0
        %vm1189 = vcmp.ne.s32.totalorder %v1025, 0
        %vm1190 = vcmp.ne.s32.totalorder %v1032, 0
        %vm1191 = vcmp.ne.s32.totalorder %v1039, 0
        %vm1192 = vcmp.ne.s32.totalorder %v1046, 0
        %vm1193 = vcmp.ne.s32.totalorder %v1053, 0
        %vm1194 = vcmp.ne.s32.totalorder %v1060, 0
        %vm1195 = vcmp.ne.s32.totalorder %v1067, 0
        %vm1196 = vcmp.ne.s32.totalorder %v1074, 0
        %vm1197 = vcmp.ne.s32.totalorder %v1081, 0
        %vm1198 = vcmp.ne.s32.totalorder %v1088, 0
        %vm1199 = vcmp.ne.s32.totalorder %v1095, 0
        %vm1200 = vcmp.ne.s32.totalorder %v1102, 0
        %vm1201 = vcmp.ne.s32.totalorder %v1109, 0
        %vm1202 = vcmp.ne.s32.totalorder %v1116, 0
        %vm1203 = vcmp.ne.s32.totalorder %v1123, 0
        %vm1204 = vcmp.ne.s32.totalorder %v1130, 0
        %vm1205 = vcmp.ne.s32.totalorder %v1137, 0
        %vm1206 = vcmp.ne.s32.totalorder %v1144, 0
        %vm1207 = vcmp.ne.s32.totalorder %v1151, 0
        %vm1208 = vcmp.ne.s32.totalorder %v1158, 0
        %vm1209 = vcmp.ne.s32.totalorder %v1165, 0
        %vm1210 = vcmp.ne.s32.totalorder %v1172, 0
        %vm1211 = vcmp.ne.s32.totalorder %v1179, 0
        %vm1212 = vcmp.lt.s32.totalorder %v962, 0
        %vm1213 = vcmp.lt.s32.totalorder %v969, 0
        %vm1214 = vcmp.lt.s32.totalorder %v976, 0
        %vm1215 = vcmp.lt.s32.totalorder %v983, 0
        %vm1216 = vcmp.lt.s32.totalorder %v990, 0
        %vm1217 = vcmp.lt.s32.totalorder %v997, 0
        %vm1218 = vcmp.lt.s32.totalorder %v1004, 0
        %vm1219 = vcmp.lt.s32.totalorder %v1011, 0
        %vm1220 = vcmp.lt.s32.totalorder %v1018, 0
        %vm1221 = vcmp.lt.s32.totalorder %v1025, 0
        %vm1222 = vcmp.lt.s32.totalorder %v1032, 0
        %vm1223 = vcmp.lt.s32.totalorder %v1039, 0
        %vm1224 = vcmp.lt.s32.totalorder %v1046, 0
        %vm1225 = vcmp.lt.s32.totalorder %v1053, 0
        %vm1226 = vcmp.lt.s32.totalorder %v1060, 0
        %vm1227 = vcmp.lt.s32.totalorder %v1067, 0
        %vm1228 = vcmp.lt.s32.totalorder %v1074, 0
        %vm1229 = vcmp.lt.s32.totalorder %v1081, 0
        %vm1230 = vcmp.lt.s32.totalorder %v1088, 0
        %vm1231 = vcmp.lt.s32.totalorder %v1095, 0
        %vm1232 = vcmp.lt.s32.totalorder %v1102, 0
        %vm1233 = vcmp.lt.s32.totalorder %v1109, 0
        %vm1234 = vcmp.lt.s32.totalorder %v1116, 0
        %vm1235 = vcmp.lt.s32.totalorder %v1123, 0
        %vm1236 = vcmp.lt.s32.totalorder %v1130, 0
        %vm1237 = vcmp.lt.s32.totalorder %v1137, 0
        %vm1238 = vcmp.lt.s32.totalorder %v1144, 0
        %vm1239 = vcmp.lt.s32.totalorder %v1151, 0
        %vm1240 = vcmp.lt.s32.totalorder %v1158, 0
        %vm1241 = vcmp.lt.s32.totalorder %v1165, 0
        %vm1242 = vcmp.lt.s32.totalorder %v1172, 0
        %vm1243 = vcmp.lt.s32.totalorder %v1179, 0
        %vm1244 = vmand %vm1212, %vm1180
        %vm1245 = vmand %vm1213, %vm1181
        %vm1246 = vmand %vm1214, %vm1182
        %vm1247 = vmand %vm1215, %vm1183
        %vm1248 = vmand %vm1216, %vm1184
        %vm1249 = vmand %vm1217, %vm1185
        %vm1250 = vmand %vm1218, %vm1186
        %vm1251 = vmand %vm1219, %vm1187
        %vm1252 = vmand %vm1220, %vm1188
        %vm1253 = vmand %vm1221, %vm1189
        %vm1254 = vmand %vm1222, %vm1190
        %vm1255 = vmand %vm1223, %vm1191
        %vm1256 = vmand %vm1224, %vm1192
        %vm1257 = vmand %vm1225, %vm1193
        %vm1258 = vmand %vm1226, %vm1194
        %vm1259 = vmand %vm1227, %vm1195
        %vm1260 = vmand %vm1228, %vm1196
        %vm1261 = vmand %vm1229, %vm1197
        %vm1262 = vmand %vm1230, %vm1198
        %vm1263 = vmand %vm1231, %vm1199
        %vm1264 = vmand %vm1232, %vm1200
        %vm1265 = vmand %vm1233, %vm1201
        %vm1266 = vmand %vm1234, %vm1202
        %vm1267 = vmand %vm1235, %vm1203
        %vm1268 = vmand %vm1236, %vm1204
        %vm1269 = vmand %vm1237, %vm1205
        %vm1270 = vmand %vm1238, %vm1206
        %vm1271 = vmand %vm1239, %vm1207
        %vm1272 = vmand %vm1240, %vm1208
        %vm1273 = vmand %vm1241, %vm1209
        %vm1274 = vmand %vm1242, %vm1210
        %vm1275 = vmand %vm1243, %vm1211
        %v1276 = vadd.s32 %v962, 16
        %v1277 = vadd.s32 %v969, 16
        %v1278 = vadd.s32 %v976, 16
        %v1279 = vadd.s32 %v983, 16
        %v1280 = vadd.s32 %v990, 16
        %v1281 = vadd.s32 %v997, 16
        %v1282 = vadd.s32 %v1004, 16
        %v1283 = vadd.s32 %v1011, 16
        %v1284 = vadd.s32 %v1018, 16
        %v1285 = vadd.s32 %v1025, 16
        %v1286 = vadd.s32 %v1032, 16
        %v1287 = vadd.s32 %v1039, 16
        %v1288 = vadd.s32 %v1046, 16
        %v1289 = vadd.s32 %v1053, 16
        %v1290 = vadd.s32 %v1060, 16
        %v1291 = vadd.s32 %v1067, 16
        %v1292 = vadd.s32 %v1074, 16
        %v1293 = vadd.s32 %v1081, 16
        %v1294 = vadd.s32 %v1088, 16
        %v1295 = vadd.s32 %v1095, 16
        %v1296 = vadd.s32 %v1102, 16
        %v1297 = vadd.s32 %v1109, 16
        %v1298 = vadd.s32 %v1116, 16
        %v1299 = vadd.s32 %v1123, 16
        %v1300 = vadd.s32 %v1130, 16
        %v1301 = vadd.s32 %v1137, 16
        %v1302 = vadd.s32 %v1144, 16
        %v1303 = vadd.s32 %v1151, 16
        %v1304 = vadd.s32 %v1158, 16
        %v1305 = vadd.s32 %v1165, 16
        %v1306 = vadd.s32 %v1172, 16
        %v1307 = vadd.s32 %v1179, 16
        %v1308 = vsel %vm1244, %v1276, %v962
        %v1309 = vsel %vm1245, %v1277, %v969
        %v1310 = vsel %vm1246, %v1278, %v976
        %v1311 = vsel %vm1247, %v1279, %v983
        %v1312 = vsel %vm1248, %v1280, %v990
        %v1313 = vsel %vm1249, %v1281, %v997
        %v1314 = vsel %vm1250, %v1282, %v1004
        %v1315 = vsel %vm1251, %v1283, %v1011
        %v1316 = vsel %vm1252, %v1284, %v1018
        %v1317 = vsel %vm1253, %v1285, %v1025
        %v1318 = vsel %vm1254, %v1286, %v1032
        %v1319 = vsel %vm1255, %v1287, %v1039
        %v1320 = vsel %vm1256, %v1288, %v1046
        %v1321 = vsel %vm1257, %v1289, %v1053
        %v1322 = vsel %vm1258, %v1290, %v1060
        %v1323 = vsel %vm1259, %v1291, %v1067
        %v1324 = vsel %vm1260, %v1292, %v1074
        %v1325 = vsel %vm1261, %v1293, %v1081
        %v1326 = vsel %vm1262, %v1294, %v1088
        %v1327 = vsel %vm1263, %v1295, %v1095
        %v1328 = vsel %vm1264, %v1296, %v1102
        %v1329 = vsel %vm1265, %v1297, %v1109
        %v1330 = vsel %vm1266, %v1298, %v1116
        %v1331 = vsel %vm1267, %v1299, %v1123
        %v1332 = vsel %vm1268, %v1300, %v1130
        %v1333 = vsel %vm1269, %v1301, %v1137
        %v1334 = vsel %vm1270, %v1302, %v1144
        %v1335 = vsel %vm1271, %v1303, %v1151
        %v1336 = vsel %vm1272, %v1304, %v1158
        %v1337 = vsel %vm1273, %v1305, %v1165
        %v1338 = vsel %vm1274, %v1306, %v1172
        %v1339 = vsel %vm1275, %v1307, %v1179
        %vm1340 = vcmp.eq.s32.totalorder %v1308, 0
        %vm1341 = vcmp.eq.s32.totalorder %v1309, 0
        %vm1342 = vcmp.eq.s32.totalorder %v1310, 0
        %vm1343 = vcmp.eq.s32.totalorder %v1311, 0
        %vm1344 = vcmp.eq.s32.totalorder %v1312, 0
        %vm1345 = vcmp.eq.s32.totalorder %v1313, 0
        %vm1346 = vcmp.eq.s32.totalorder %v1314, 0
        %vm1347 = vcmp.eq.s32.totalorder %v1315, 0
        %vm1348 = vcmp.eq.s32.totalorder %v1316, 0
        %vm1349 = vcmp.eq.s32.totalorder %v1317, 0
        %vm1350 = vcmp.eq.s32.totalorder %v1318, 0
        %vm1351 = vcmp.eq.s32.totalorder %v1319, 0
        %vm1352 = vcmp.eq.s32.totalorder %v1320, 0
        %vm1353 = vcmp.eq.s32.totalorder %v1321, 0
        %vm1354 = vcmp.eq.s32.totalorder %v1322, 0
        %vm1355 = vcmp.eq.s32.totalorder %v1323, 0
        %vm1356 = vcmp.eq.s32.totalorder %v1324, 0
        %vm1357 = vcmp.eq.s32.totalorder %v1325, 0
        %vm1358 = vcmp.eq.s32.totalorder %v1326, 0
        %vm1359 = vcmp.eq.s32.totalorder %v1327, 0
        %vm1360 = vcmp.eq.s32.totalorder %v1328, 0
        %vm1361 = vcmp.eq.s32.totalorder %v1329, 0
        %vm1362 = vcmp.eq.s32.totalorder %v1330, 0
        %vm1363 = vcmp.eq.s32.totalorder %v1331, 0
        %vm1364 = vcmp.eq.s32.totalorder %v1332, 0
        %vm1365 = vcmp.eq.s32.totalorder %v1333, 0
        %vm1366 = vcmp.eq.s32.totalorder %v1334, 0
        %vm1367 = vcmp.eq.s32.totalorder %v1335, 0
        %vm1368 = vcmp.eq.s32.totalorder %v1336, 0
        %vm1369 = vcmp.eq.s32.totalorder %v1337, 0
        %vm1370 = vcmp.eq.s32.totalorder %v1338, 0
        %vm1371 = vcmp.eq.s32.totalorder %v1339, 0
        %vm1372 = vcmp.lt.s32.totalorder %v924, 16
        %vm1373 = vcmp.lt.s32.totalorder %v925, 16
        %vm1374 = vcmp.lt.s32.totalorder %v926, 16
        %vm1375 = vcmp.lt.s32.totalorder %v927, 16
        %vm1376 = vcmp.lt.s32.totalorder %v928, 16
        %vm1377 = vcmp.lt.s32.totalorder %v929, 16
        %vm1378 = vcmp.lt.s32.totalorder %v930, 16
        %vm1379 = vcmp.lt.s32.totalorder %v931, 16
        %vm1380 = vcmp.lt.s32.totalorder %v932, 16
        %vm1381 = vcmp.lt.s32.totalorder %v933, 16
        %vm1382 = vcmp.lt.s32.totalorder %v934, 16
        %vm1383 = vcmp.lt.s32.totalorder %v935, 16
        %vm1384 = vcmp.lt.s32.totalorder %v936, 16
        %vm1385 = vcmp.lt.s32.totalorder %v937, 16
        %vm1386 = vcmp.lt.s32.totalorder %v938, 16
        %vm1387 = vcmp.lt.s32.totalorder %v939, 16
        %vm1388 = vcmp.lt.s32.totalorder %v940, 16
        %vm1389 = vcmp.lt.s32.totalorder %v941, 16
        %vm1390 = vcmp.lt.s32.totalorder %v942, 16
        %vm1391 = vcmp.lt.s32.totalorder %v943, 16
        %vm1392 = vcmp.lt.s32.totalorder %v944, 16
        %vm1393 = vcmp.lt.s32.totalorder %v945, 16
        %vm1394 = vcmp.lt.s32.totalorder %v946, 16
        %vm1395 = vcmp.lt.s32.totalorder %v947, 16
        %vm1396 = vcmp.lt.s32.totalorder %v948, 16
        %vm1397 = vcmp.lt.s32.totalorder %v949, 16
        %vm1398 = vcmp.lt.s32.totalorder %v950, 16
        %vm1399 = vcmp.lt.s32.totalorder %v951, 16
        %vm1400 = vcmp.lt.s32.totalorder %v952, 16
        %vm1401 = vcmp.lt.s32.totalorder %v953, 16
        %vm1402 = vcmp.lt.s32.totalorder %v954, 16
        %vm1403 = vcmp.lt.s32.totalorder %v955, 16
        %p1404 = scmp.eq.s32.totalorder %s26, 0
        %s1405 = scalar_select %p1404, 1, 0
        %v1406 = vstv %s1405
        %vm1407 = vcmp.eq.s32.totalorder %v1406, 1
        %vm1408 = vmand %vm1372, %vm1407
        %vm1409 = vmand %vm1373, %vm1407
        %vm1410 = vmand %vm1374, %vm1407
        %vm1411 = vmand %vm1375, %vm1407
        %vm1412 = vmand %vm1376, %vm1407
        %vm1413 = vmand %vm1377, %vm1407
        %vm1414 = vmand %vm1378, %vm1407
        %vm1415 = vmand %vm1379, %vm1407
        %vm1416 = vmand %vm1380, %vm1407
        %vm1417 = vmand %vm1381, %vm1407
        %vm1418 = vmand %vm1382, %vm1407
        %vm1419 = vmand %vm1383, %vm1407
        %vm1420 = vmand %vm1384, %vm1407
        %vm1421 = vmand %vm1385, %vm1407
        %vm1422 = vmand %vm1386, %vm1407
        %vm1423 = vmand %vm1387, %vm1407
        %vm1424 = vmand %vm1388, %vm1407
        %vm1425 = vmand %vm1389, %vm1407
        %vm1426 = vmand %vm1390, %vm1407
        %vm1427 = vmand %vm1391, %vm1407
        %vm1428 = vmand %vm1392, %vm1407
        %vm1429 = vmand %vm1393, %vm1407
        %vm1430 = vmand %vm1394, %vm1407
        %vm1431 = vmand %vm1395, %vm1407
        %vm1432 = vmand %vm1396, %vm1407
        %vm1433 = vmand %vm1397, %vm1407
        %vm1434 = vmand %vm1398, %vm1407
        %vm1435 = vmand %vm1399, %vm1407
        %vm1436 = vmand %vm1400, %vm1407
        %vm1437 = vmand %vm1401, %vm1407
        %vm1438 = vmand %vm1402, %vm1407
        %vm1439 = vmand %vm1403, %vm1407
        %vm1440 = vmor %vm1408, %vm1340
        %vm1441 = vmor %vm1409, %vm1341
        %vm1442 = vmor %vm1410, %vm1342
        %vm1443 = vmor %vm1411, %vm1343
        %vm1444 = vmor %vm1412, %vm1344
        %vm1445 = vmor %vm1413, %vm1345
        %vm1446 = vmor %vm1414, %vm1346
        %vm1447 = vmor %vm1415, %vm1347
        %vm1448 = vmor %vm1416, %vm1348
        %vm1449 = vmor %vm1417, %vm1349
        %vm1450 = vmor %vm1418, %vm1350
        %vm1451 = vmor %vm1419, %vm1351
        %vm1452 = vmor %vm1420, %vm1352
        %vm1453 = vmor %vm1421, %vm1353
        %vm1454 = vmor %vm1422, %vm1354
        %vm1455 = vmor %vm1423, %vm1355
        %vm1456 = vmor %vm1424, %vm1356
        %vm1457 = vmor %vm1425, %vm1357
        %vm1458 = vmor %vm1426, %vm1358
        %vm1459 = vmor %vm1427, %vm1359
        %vm1460 = vmor %vm1428, %vm1360
        %vm1461 = vmor %vm1429, %vm1361
        %vm1462 = vmor %vm1430, %vm1362
        %vm1463 = vmor %vm1431, %vm1363
        %vm1464 = vmor %vm1432, %vm1364
        %vm1465 = vmor %vm1433, %vm1365
        %vm1466 = vmor %vm1434, %vm1366
        %vm1467 = vmor %vm1435, %vm1367
        %vm1468 = vmor %vm1436, %vm1368
        %vm1469 = vmor %vm1437, %vm1369
        %vm1470 = vmor %vm1438, %vm1370
        %vm1471 = vmor %vm1439, %vm1371
        %v1472 = vsel %vm1440, 1, 0
        %v1473 = vsel %vm1441, 1, 0
        %v1474 = vsel %vm1442, 1, 0
        %v1475 = vsel %vm1443, 1, 0
        %v1476 = vsel %vm1444, 1, 0
        %v1477 = vsel %vm1445, 1, 0
        %v1478 = vsel %vm1446, 1, 0
        %v1479 = vsel %vm1447, 1, 0
        %v1480 = vsel %vm1448, 1, 0
        %v1481 = vsel %vm1449, 1, 0
        %v1482 = vsel %vm1450, 1, 0
        %v1483 = vsel %vm1451, 1, 0
        %v1484 = vsel %vm1452, 1, 0
        %v1485 = vsel %vm1453, 1, 0
        %v1486 = vsel %vm1454, 1, 0
        %v1487 = vsel %vm1455, 1, 0
        %v1488 = vsel %vm1456, 1, 0
        %v1489 = vsel %vm1457, 1, 0
        %v1490 = vsel %vm1458, 1, 0
        %v1491 = vsel %vm1459, 1, 0
        %v1492 = vsel %vm1460, 1, 0
        %v1493 = vsel %vm1461, 1, 0
        %v1494 = vsel %vm1462, 1, 0
        %v1495 = vsel %vm1463, 1, 0
        %v1496 = vsel %vm1464, 1, 0
        %v1497 = vsel %vm1465, 1, 0
        %v1498 = vsel %vm1466, 1, 0
        %v1499 = vsel %vm1467, 1, 0
        %v1500 = vsel %vm1468, 1, 0
        %v1501 = vsel %vm1469, 1, 0
        %v1502 = vsel %vm1470, 1, 0
        %v1503 = vsel %vm1471, 1, 0
        %vm1504 = vcmp.eq.s32.totalorder %v1472, 1
        %vm1505 = vcmp.eq.s32.totalorder %v1473, 1
        %vm1506 = vcmp.eq.s32.totalorder %v1474, 1
        %vm1507 = vcmp.eq.s32.totalorder %v1475, 1
        %vm1508 = vcmp.eq.s32.totalorder %v1476, 1
        %vm1509 = vcmp.eq.s32.totalorder %v1477, 1
        %vm1510 = vcmp.eq.s32.totalorder %v1478, 1
        %vm1511 = vcmp.eq.s32.totalorder %v1479, 1
        %vm1512 = vcmp.eq.s32.totalorder %v1480, 1
        %vm1513 = vcmp.eq.s32.totalorder %v1481, 1
        %vm1514 = vcmp.eq.s32.totalorder %v1482, 1
        %vm1515 = vcmp.eq.s32.totalorder %v1483, 1
        %vm1516 = vcmp.eq.s32.totalorder %v1484, 1
        %vm1517 = vcmp.eq.s32.totalorder %v1485, 1
        %vm1518 = vcmp.eq.s32.totalorder %v1486, 1
        %vm1519 = vcmp.eq.s32.totalorder %v1487, 1
        %vm1520 = vcmp.eq.s32.totalorder %v1488, 1
        %vm1521 = vcmp.eq.s32.totalorder %v1489, 1
        %vm1522 = vcmp.eq.s32.totalorder %v1490, 1
        %vm1523 = vcmp.eq.s32.totalorder %v1491, 1
        %vm1524 = vcmp.eq.s32.totalorder %v1492, 1
        %vm1525 = vcmp.eq.s32.totalorder %v1493, 1
        %vm1526 = vcmp.eq.s32.totalorder %v1494, 1
        %vm1527 = vcmp.eq.s32.totalorder %v1495, 1
        %vm1528 = vcmp.eq.s32.totalorder %v1496, 1
        %vm1529 = vcmp.eq.s32.totalorder %v1497, 1
        %vm1530 = vcmp.eq.s32.totalorder %v1498, 1
        %vm1531 = vcmp.eq.s32.totalorder %v1499, 1
        %vm1532 = vcmp.eq.s32.totalorder %v1500, 1
        %vm1533 = vcmp.eq.s32.totalorder %v1501, 1
        %vm1534 = vcmp.eq.s32.totalorder %v1502, 1
        %vm1535 = vcmp.eq.s32.totalorder %v1503, 1
        %v1536 = vsel %vm1504, -1e+30, %v855
        %v1537 = vsel %vm1505, -1e+30, %v856
        %v1538 = vsel %vm1506, -1e+30, %v857
        %v1539 = vsel %vm1507, -1e+30, %v858
        %v1540 = vsel %vm1508, -1e+30, %v859
        %v1541 = vsel %vm1509, -1e+30, %v860
        %v1542 = vsel %vm1510, -1e+30, %v861
        %v1543 = vsel %vm1511, -1e+30, %v862
        %v1544 = vsel %vm1512, -1e+30, %v863
        %v1545 = vsel %vm1513, -1e+30, %v864
        %v1546 = vsel %vm1514, -1e+30, %v865
        %v1547 = vsel %vm1515, -1e+30, %v866
        %v1548 = vsel %vm1516, -1e+30, %v867
        %v1549 = vsel %vm1517, -1e+30, %v868
        %v1550 = vsel %vm1518, -1e+30, %v869
        %v1551 = vsel %vm1519, -1e+30, %v870
        %v1552 = vsel %vm1520, -1e+30, %v871
        %v1553 = vsel %vm1521, -1e+30, %v872
        %v1554 = vsel %vm1522, -1e+30, %v873
        %v1555 = vsel %vm1523, -1e+30, %v874
        %v1556 = vsel %vm1524, -1e+30, %v875
        %v1557 = vsel %vm1525, -1e+30, %v876
        %v1558 = vsel %vm1526, -1e+30, %v877
        %v1559 = vsel %vm1527, -1e+30, %v878
        %v1560 = vsel %vm1528, -1e+30, %v879
        %v1561 = vsel %vm1529, -1e+30, %v880
        %v1562 = vsel %vm1530, -1e+30, %v881
        %v1563 = vsel %vm1531, -1e+30, %v882
        %v1564 = vsel %vm1532, -1e+30, %v883
        %v1565 = vsel %vm1533, -1e+30, %v884
        %v1566 = vsel %vm1534, -1e+30, %v885
        %v1567 = vsel %vm1535, -1e+30, %v886
        %v1568 = vsel %vm1408, 1, 0
        %v1569 = vsel %vm1409, 1, 0
        %v1570 = vsel %vm1410, 1, 0
        %v1571 = vsel %vm1411, 1, 0
        %v1572 = vsel %vm1412, 1, 0
        %v1573 = vsel %vm1413, 1, 0
        %v1574 = vsel %vm1414, 1, 0
        %v1575 = vsel %vm1415, 1, 0
        %v1576 = vsel %vm1416, 1, 0
        %v1577 = vsel %vm1417, 1, 0
        %v1578 = vsel %vm1418, 1, 0
        %v1579 = vsel %vm1419, 1, 0
        %v1580 = vsel %vm1420, 1, 0
        %v1581 = vsel %vm1421, 1, 0
        %v1582 = vsel %vm1422, 1, 0
        %v1583 = vsel %vm1423, 1, 0
        %v1584 = vsel %vm1424, 1, 0
        %v1585 = vsel %vm1425, 1, 0
        %v1586 = vsel %vm1426, 1, 0
        %v1587 = vsel %vm1427, 1, 0
        %v1588 = vsel %vm1428, 1, 0
        %v1589 = vsel %vm1429, 1, 0
        %v1590 = vsel %vm1430, 1, 0
        %v1591 = vsel %vm1431, 1, 0
        %v1592 = vsel %vm1432, 1, 0
        %v1593 = vsel %vm1433, 1, 0
        %v1594 = vsel %vm1434, 1, 0
        %v1595 = vsel %vm1435, 1, 0
        %v1596 = vsel %vm1436, 1, 0
        %v1597 = vsel %vm1437, 1, 0
        %v1598 = vsel %vm1438, 1, 0
        %v1599 = vsel %vm1439, 1, 0
        %vm1600 = vcmp.eq.s32.totalorder %v1568, 1
        %vm1601 = vcmp.eq.s32.totalorder %v1569, 1
        %vm1602 = vcmp.eq.s32.totalorder %v1570, 1
        %vm1603 = vcmp.eq.s32.totalorder %v1571, 1
        %vm1604 = vcmp.eq.s32.totalorder %v1572, 1
        %vm1605 = vcmp.eq.s32.totalorder %v1573, 1
        %vm1606 = vcmp.eq.s32.totalorder %v1574, 1
        %vm1607 = vcmp.eq.s32.totalorder %v1575, 1
        %vm1608 = vcmp.eq.s32.totalorder %v1576, 1
        %vm1609 = vcmp.eq.s32.totalorder %v1577, 1
        %vm1610 = vcmp.eq.s32.totalorder %v1578, 1
        %vm1611 = vcmp.eq.s32.totalorder %v1579, 1
        %vm1612 = vcmp.eq.s32.totalorder %v1580, 1
        %vm1613 = vcmp.eq.s32.totalorder %v1581, 1
        %vm1614 = vcmp.eq.s32.totalorder %v1582, 1
        %vm1615 = vcmp.eq.s32.totalorder %v1583, 1
        %vm1616 = vcmp.eq.s32.totalorder %v1584, 1
        %vm1617 = vcmp.eq.s32.totalorder %v1585, 1
        %vm1618 = vcmp.eq.s32.totalorder %v1586, 1
        %vm1619 = vcmp.eq.s32.totalorder %v1587, 1
        %vm1620 = vcmp.eq.s32.totalorder %v1588, 1
        %vm1621 = vcmp.eq.s32.totalorder %v1589, 1
        %vm1622 = vcmp.eq.s32.totalorder %v1590, 1
        %vm1623 = vcmp.eq.s32.totalorder %v1591, 1
        %vm1624 = vcmp.eq.s32.totalorder %v1592, 1
        %vm1625 = vcmp.eq.s32.totalorder %v1593, 1
        %vm1626 = vcmp.eq.s32.totalorder %v1594, 1
        %vm1627 = vcmp.eq.s32.totalorder %v1595, 1
        %vm1628 = vcmp.eq.s32.totalorder %v1596, 1
        %vm1629 = vcmp.eq.s32.totalorder %v1597, 1
        %vm1630 = vcmp.eq.s32.totalorder %v1598, 1
        %vm1631 = vcmp.eq.s32.totalorder %v1599, 1
        %v1632 = vsel %vm1600, -1e+30, %v855
        %v1633 = vsel %vm1601, -1e+30, %v856
        %v1634 = vsel %vm1602, -1e+30, %v857
        %v1635 = vsel %vm1603, -1e+30, %v858
        %v1636 = vsel %vm1604, -1e+30, %v859
        %v1637 = vsel %vm1605, -1e+30, %v860
        %v1638 = vsel %vm1606, -1e+30, %v861
        %v1639 = vsel %vm1607, -1e+30, %v862
        %v1640 = vsel %vm1608, -1e+30, %v863
        %v1641 = vsel %vm1609, -1e+30, %v864
        %v1642 = vsel %vm1610, -1e+30, %v865
        %v1643 = vsel %vm1611, -1e+30, %v866
        %v1644 = vsel %vm1612, -1e+30, %v867
        %v1645 = vsel %vm1613, -1e+30, %v868
        %v1646 = vsel %vm1614, -1e+30, %v869
        %v1647 = vsel %vm1615, -1e+30, %v870
        %v1648 = vsel %vm1616, -1e+30, %v871
        %v1649 = vsel %vm1617, -1e+30, %v872
        %v1650 = vsel %vm1618, -1e+30, %v873
        %v1651 = vsel %vm1619, -1e+30, %v874
        %v1652 = vsel %vm1620, -1e+30, %v875
        %v1653 = vsel %vm1621, -1e+30, %v876
        %v1654 = vsel %vm1622, -1e+30, %v877
        %v1655 = vsel %vm1623, -1e+30, %v878
        %v1656 = vsel %vm1624, -1e+30, %v879
        %v1657 = vsel %vm1625, -1e+30, %v880
        %v1658 = vsel %vm1626, -1e+30, %v881
        %v1659 = vsel %vm1627, -1e+30, %v882
        %v1660 = vsel %vm1628, -1e+30, %v883
        %v1661 = vsel %vm1629, -1e+30, %v884
        %v1662 = vsel %vm1630, -1e+30, %v885
        %v1663 = vsel %vm1631, -1e+30, %v886
        %v1664 = vsel %vm1340, 1, 0
        %v1665 = vsel %vm1341, 1, 0
        %v1666 = vsel %vm1342, 1, 0
        %v1667 = vsel %vm1343, 1, 0
        %v1668 = vsel %vm1344, 1, 0
        %v1669 = vsel %vm1345, 1, 0
        %v1670 = vsel %vm1346, 1, 0
        %v1671 = vsel %vm1347, 1, 0
        %v1672 = vsel %vm1348, 1, 0
        %v1673 = vsel %vm1349, 1, 0
        %v1674 = vsel %vm1350, 1, 0
        %v1675 = vsel %vm1351, 1, 0
        %v1676 = vsel %vm1352, 1, 0
        %v1677 = vsel %vm1353, 1, 0
        %v1678 = vsel %vm1354, 1, 0
        %v1679 = vsel %vm1355, 1, 0
        %v1680 = vsel %vm1356, 1, 0
        %v1681 = vsel %vm1357, 1, 0
        %v1682 = vsel %vm1358, 1, 0
        %v1683 = vsel %vm1359, 1, 0
        %v1684 = vsel %vm1360, 1, 0
        %v1685 = vsel %vm1361, 1, 0
        %v1686 = vsel %vm1362, 1, 0
        %v1687 = vsel %vm1363, 1, 0
        %v1688 = vsel %vm1364, 1, 0
        %v1689 = vsel %vm1365, 1, 0
        %v1690 = vsel %vm1366, 1, 0
        %v1691 = vsel %vm1367, 1, 0
        %v1692 = vsel %vm1368, 1, 0
        %v1693 = vsel %vm1369, 1, 0
        %v1694 = vsel %vm1370, 1, 0
        %v1695 = vsel %vm1371, 1, 0
        %vm1696 = vcmp.eq.s32.totalorder %v1664, 1
        %vm1697 = vcmp.eq.s32.totalorder %v1665, 1
        %vm1698 = vcmp.eq.s32.totalorder %v1666, 1
        %vm1699 = vcmp.eq.s32.totalorder %v1667, 1
        %vm1700 = vcmp.eq.s32.totalorder %v1668, 1
        %vm1701 = vcmp.eq.s32.totalorder %v1669, 1
        %vm1702 = vcmp.eq.s32.totalorder %v1670, 1
        %vm1703 = vcmp.eq.s32.totalorder %v1671, 1
        %vm1704 = vcmp.eq.s32.totalorder %v1672, 1
        %vm1705 = vcmp.eq.s32.totalorder %v1673, 1
        %vm1706 = vcmp.eq.s32.totalorder %v1674, 1
        %vm1707 = vcmp.eq.s32.totalorder %v1675, 1
        %vm1708 = vcmp.eq.s32.totalorder %v1676, 1
        %vm1709 = vcmp.eq.s32.totalorder %v1677, 1
        %vm1710 = vcmp.eq.s32.totalorder %v1678, 1
        %vm1711 = vcmp.eq.s32.totalorder %v1679, 1
        %vm1712 = vcmp.eq.s32.totalorder %v1680, 1
        %vm1713 = vcmp.eq.s32.totalorder %v1681, 1
        %vm1714 = vcmp.eq.s32.totalorder %v1682, 1
        %vm1715 = vcmp.eq.s32.totalorder %v1683, 1
        %vm1716 = vcmp.eq.s32.totalorder %v1684, 1
        %vm1717 = vcmp.eq.s32.totalorder %v1685, 1
        %vm1718 = vcmp.eq.s32.totalorder %v1686, 1
        %vm1719 = vcmp.eq.s32.totalorder %v1687, 1
        %vm1720 = vcmp.eq.s32.totalorder %v1688, 1
        %vm1721 = vcmp.eq.s32.totalorder %v1689, 1
        %vm1722 = vcmp.eq.s32.totalorder %v1690, 1
        %vm1723 = vcmp.eq.s32.totalorder %v1691, 1
        %vm1724 = vcmp.eq.s32.totalorder %v1692, 1
        %vm1725 = vcmp.eq.s32.totalorder %v1693, 1
        %vm1726 = vcmp.eq.s32.totalorder %v1694, 1
        %vm1727 = vcmp.eq.s32.totalorder %v1695, 1
        %v1728 = vsel %vm1696, -1e+30, %v855
        %v1729 = vsel %vm1697, -1e+30, %v856
        %v1730 = vsel %vm1698, -1e+30, %v857
        %v1731 = vsel %vm1699, -1e+30, %v858
        %v1732 = vsel %vm1700, -1e+30, %v859
        %v1733 = vsel %vm1701, -1e+30, %v860
        %v1734 = vsel %vm1702, -1e+30, %v861
        %v1735 = vsel %vm1703, -1e+30, %v862
        %v1736 = vsel %vm1704, -1e+30, %v863
        %v1737 = vsel %vm1705, -1e+30, %v864
        %v1738 = vsel %vm1706, -1e+30, %v865
        %v1739 = vsel %vm1707, -1e+30, %v866
        %v1740 = vsel %vm1708, -1e+30, %v867
        %v1741 = vsel %vm1709, -1e+30, %v868
        %v1742 = vsel %vm1710, -1e+30, %v869
        %v1743 = vsel %vm1711, -1e+30, %v870
        %v1744 = vsel %vm1712, -1e+30, %v871
        %v1745 = vsel %vm1713, -1e+30, %v872
        %v1746 = vsel %vm1714, -1e+30, %v873
        %v1747 = vsel %vm1715, -1e+30, %v874
        %v1748 = vsel %vm1716, -1e+30, %v875
        %v1749 = vsel %vm1717, -1e+30, %v876
        %v1750 = vsel %vm1718, -1e+30, %v877
        %v1751 = vsel %vm1719, -1e+30, %v878
        %v1752 = vsel %vm1720, -1e+30, %v879
        %v1753 = vsel %vm1721, -1e+30, %v880
        %v1754 = vsel %vm1722, -1e+30, %v881
        %v1755 = vsel %vm1723, -1e+30, %v882
        %v1756 = vsel %vm1724, -1e+30, %v883
        %v1757 = vsel %vm1725, -1e+30, %v884
        %v1758 = vsel %vm1726, -1e+30, %v885
        %v1759 = vsel %vm1727, -1e+30, %v886
        %v1760 = vsel %vm1600, -1e+30, %v887
        %v1761 = vsel %vm1601, -1e+30, %v888
        %v1762 = vsel %vm1602, -1e+30, %v889
        %v1763 = vsel %vm1603, -1e+30, %v890
        %v1764 = vsel %vm1604, -1e+30, %v891
        %v1765 = vsel %vm1605, -1e+30, %v892
        %v1766 = vsel %vm1606, -1e+30, %v893
        %v1767 = vsel %vm1607, -1e+30, %v894
        %v1768 = vsel %vm1608, -1e+30, %v895
        %v1769 = vsel %vm1609, -1e+30, %v896
        %v1770 = vsel %vm1610, -1e+30, %v897
        %v1771 = vsel %vm1611, -1e+30, %v898
        %v1772 = vsel %vm1612, -1e+30, %v899
        %v1773 = vsel %vm1613, -1e+30, %v900
        %v1774 = vsel %vm1614, -1e+30, %v901
        %v1775 = vsel %vm1615, -1e+30, %v902
        %v1776 = vsel %vm1616, -1e+30, %v903
        %v1777 = vsel %vm1617, -1e+30, %v904
        %v1778 = vsel %vm1618, -1e+30, %v905
        %v1779 = vsel %vm1619, -1e+30, %v906
        %v1780 = vsel %vm1620, -1e+30, %v907
        %v1781 = vsel %vm1621, -1e+30, %v908
        %v1782 = vsel %vm1622, -1e+30, %v909
        %v1783 = vsel %vm1623, -1e+30, %v910
        %v1784 = vsel %vm1624, -1e+30, %v911
        %v1785 = vsel %vm1625, -1e+30, %v912
        %v1786 = vsel %vm1626, -1e+30, %v913
        %v1787 = vsel %vm1627, -1e+30, %v914
        %v1788 = vsel %vm1628, -1e+30, %v915
        %v1789 = vsel %vm1629, -1e+30, %v916
        %v1790 = vsel %vm1630, -1e+30, %v917
        %v1791 = vsel %vm1631, -1e+30, %v918
        %v1792 = vsel %vm1696, -1e+30, %v857
        %v1793 = vsel %vm1697, -1e+30, %v858
        %v1794 = vsel %vm1698, -1e+30, %v859
        %v1795 = vsel %vm1699, -1e+30, %v860
        %v1796 = vsel %vm1700, -1e+30, %v861
        %v1797 = vsel %vm1701, -1e+30, %v862
        %v1798 = vsel %vm1702, -1e+30, %v863
        %v1799 = vsel %vm1703, -1e+30, %v864
        %v1800 = vsel %vm1704, -1e+30, %v865
        %v1801 = vsel %vm1705, -1e+30, %v866
        %v1802 = vsel %vm1706, -1e+30, %v867
        %v1803 = vsel %vm1707, -1e+30, %v868
        %v1804 = vsel %vm1708, -1e+30, %v869
        %v1805 = vsel %vm1709, -1e+30, %v870
        %v1806 = vsel %vm1710, -1e+30, %v871
        %v1807 = vsel %vm1711, -1e+30, %v872
        %v1808 = vsel %vm1712, -1e+30, %v873
        %v1809 = vsel %vm1713, -1e+30, %v874
        %v1810 = vsel %vm1714, -1e+30, %v875
        %v1811 = vsel %vm1715, -1e+30, %v876
        %v1812 = vsel %vm1716, -1e+30, %v877
        %v1813 = vsel %vm1717, -1e+30, %v878
        %v1814 = vsel %vm1718, -1e+30, %v879
        %v1815 = vsel %vm1719, -1e+30, %v880
        %v1816 = vsel %vm1720, -1e+30, %v881
        %v1817 = vsel %vm1721, -1e+30, %v882
        %v1818 = vsel %vm1722, -1e+30, %v883
        %v1819 = vsel %vm1723, -1e+30, %v884
        %v1820 = vsel %vm1724, -1e+30, %v885
        %v1821 = vsel %vm1725, -1e+30, %v886
        %v1822 = vsel %vm1726, -1e+30, %v919
        %v1823 = vsel %vm1727, -1e+30, %v920
        %1856 = vrot.lane.b32.xlu0 %v1632, 125
        %v1857 = vpop.permute.xlu0 %1856
        %1858 = vrot.lane.b32.xlu0 %v1633, 125
        %v1859 = vpop.permute.xlu0 %1858
        %1860 = vrot.lane.b32.xlu0 %v1634, 125
        %v1861 = vpop.permute.xlu0 %1860
        %1862 = vrot.lane.b32.xlu0 %v1635, 125
        %v1863 = vpop.permute.xlu0 %1862
        %1864 = vrot.lane.b32.xlu0 %v1636, 125
        %v1865 = vpop.permute.xlu0 %1864
        %1866 = vrot.lane.b32.xlu0 %v1637, 125
        %v1867 = vpop.permute.xlu0 %1866
        %1868 = vrot.lane.b32.xlu0 %v1638, 125
        %v1869 = vpop.permute.xlu0 %1868
        %1870 = vrot.lane.b32.xlu0 %v1639, 125
        %v1871 = vpop.permute.xlu0 %1870
        %1872 = vrot.lane.b32.xlu0 %v1640, 125
        %v1873 = vpop.permute.xlu0 %1872
        %1874 = vrot.lane.b32.xlu0 %v1641, 125
        %v1875 = vpop.permute.xlu0 %1874
        %1876 = vrot.lane.b32.xlu0 %v1642, 125
        %v1877 = vpop.permute.xlu0 %1876
        %1878 = vrot.lane.b32.xlu0 %v1643, 125
        %v1879 = vpop.permute.xlu0 %1878
        %1880 = vrot.lane.b32.xlu0 %v1644, 125
        %v1881 = vpop.permute.xlu0 %1880
        %1882 = vrot.lane.b32.xlu0 %v1645, 125
        %v1883 = vpop.permute.xlu0 %1882
        %1884 = vrot.lane.b32.xlu0 %v1646, 125
        %v1885 = vpop.permute.xlu0 %1884
        %1886 = vrot.lane.b32.xlu0 %v1647, 125
        %v1887 = vpop.permute.xlu0 %1886
        %1888 = vrot.lane.b32.xlu0 %v1648, 125
        %v1889 = vpop.permute.xlu0 %1888
        %1890 = vrot.lane.b32.xlu0 %v1649, 125
        %v1891 = vpop.permute.xlu0 %1890
        %1892 = vrot.lane.b32.xlu0 %v1650, 125
        %v1893 = vpop.permute.xlu0 %1892
        %1894 = vrot.lane.b32.xlu0 %v1651, 125
        %v1895 = vpop.permute.xlu0 %1894
        %1896 = vrot.lane.b32.xlu0 %v1652, 125
        %v1897 = vpop.permute.xlu0 %1896
        %1898 = vrot.lane.b32.xlu0 %v1653, 125
        %v1899 = vpop.permute.xlu0 %1898
        %1900 = vrot.lane.b32.xlu0 %v1654, 125
        %v1901 = vpop.permute.xlu0 %1900
        %1902 = vrot.lane.b32.xlu0 %v1655, 125
        %v1903 = vpop.permute.xlu0 %1902
        %1904 = vrot.lane.b32.xlu0 %v1656, 125
        %v1905 = vpop.permute.xlu0 %1904
        %1906 = vrot.lane.b32.xlu0 %v1657, 125
        %v1907 = vpop.permute.xlu0 %1906
        %1908 = vrot.lane.b32.xlu0 %v1658, 125
        %v1909 = vpop.permute.xlu0 %1908
        %1910 = vrot.lane.b32.xlu0 %v1659, 125
        %v1911 = vpop.permute.xlu0 %1910
        %1912 = vrot.lane.b32.xlu0 %v1660, 125
        %v1913 = vpop.permute.xlu0 %1912
        %1914 = vrot.lane.b32.xlu0 %v1661, 125
        %v1915 = vpop.permute.xlu0 %1914
        %1916 = vrot.lane.b32.xlu0 %v1662, 125
        %v1917 = vpop.permute.xlu0 %1916
        %1918 = vrot.lane.b32.xlu0 %v1663, 125
        %v1919 = vpop.permute.xlu0 %1918
        %v1952 = vmax.f32 %v1536, %v1857
        %v1953 = vmax.f32 %v1537, %v1859
        %v1954 = vmax.f32 %v1538, %v1861
        %v1955 = vmax.f32 %v1539, %v1863
        %v1956 = vmax.f32 %v1540, %v1865
        %v1957 = vmax.f32 %v1541, %v1867
        %v1958 = vmax.f32 %v1542, %v1869
        %v1959 = vmax.f32 %v1543, %v1871
        %v1960 = vmax.f32 %v1544, %v1873
        %v1961 = vmax.f32 %v1545, %v1875
        %v1962 = vmax.f32 %v1546, %v1877
        %v1963 = vmax.f32 %v1547, %v1879
        %v1964 = vmax.f32 %v1548, %v1881
        %v1965 = vmax.f32 %v1549, %v1883
        %v1966 = vmax.f32 %v1550, %v1885
        %v1967 = vmax.f32 %v1551, %v1887
        %v1968 = vmax.f32 %v1552, %v1889
        %v1969 = vmax.f32 %v1553, %v1891
        %v1970 = vmax.f32 %v1554, %v1893
        %v1971 = vmax.f32 %v1555, %v1895
        %v1972 = vmax.f32 %v1556, %v1897
        %v1973 = vmax.f32 %v1557, %v1899
        %v1974 = vmax.f32 %v1558, %v1901
        %v1975 = vmax.f32 %v1559, %v1903
        %v1976 = vmax.f32 %v1560, %v1905
        %v1977 = vmax.f32 %v1561, %v1907
        %v1978 = vmax.f32 %v1562, %v1909
        %v1979 = vmax.f32 %v1563, %v1911
        %v1980 = vmax.f32 %v1564, %v1913
        %v1981 = vmax.f32 %v1565, %v1915
        %v1982 = vmax.f32 %v1566, %v1917
        %v1983 = vmax.f32 %v1567, %v1919
        %2016 = vrot.lane.b32.xlu0 %v855, 125
        %v2017 = vpop.permute.xlu0 %2016
        %2018 = vrot.lane.b32.xlu0 %v856, 125
        %v2019 = vpop.permute.xlu0 %2018
        %2020 = vrot.lane.b32.xlu0 %v857, 125
        %v2021 = vpop.permute.xlu0 %2020
        %2022 = vrot.lane.b32.xlu0 %v858, 125
        %v2023 = vpop.permute.xlu0 %2022
        %2024 = vrot.lane.b32.xlu0 %v859, 125
        %v2025 = vpop.permute.xlu0 %2024
        %2026 = vrot.lane.b32.xlu0 %v860, 125
        %v2027 = vpop.permute.xlu0 %2026
        %2028 = vrot.lane.b32.xlu0 %v861, 125
        %v2029 = vpop.permute.xlu0 %2028
        %2030 = vrot.lane.b32.xlu0 %v862, 125
        %v2031 = vpop.permute.xlu0 %2030
        %2032 = vrot.lane.b32.xlu0 %v863, 125
        %v2033 = vpop.permute.xlu0 %2032
        %2034 = vrot.lane.b32.xlu0 %v864, 125
        %v2035 = vpop.permute.xlu0 %2034
        %2036 = vrot.lane.b32.xlu0 %v865, 125
        %v2037 = vpop.permute.xlu0 %2036
        %2038 = vrot.lane.b32.xlu0 %v866, 125
        %v2039 = vpop.permute.xlu0 %2038
        %2040 = vrot.lane.b32.xlu0 %v867, 125
        %v2041 = vpop.permute.xlu0 %2040
        %2042 = vrot.lane.b32.xlu0 %v868, 125
        %v2043 = vpop.permute.xlu0 %2042
        %2044 = vrot.lane.b32.xlu0 %v869, 125
        %v2045 = vpop.permute.xlu0 %2044
        %2046 = vrot.lane.b32.xlu0 %v870, 125
        %v2047 = vpop.permute.xlu0 %2046
        %2048 = vrot.lane.b32.xlu0 %v871, 125
        %v2049 = vpop.permute.xlu0 %2048
        %2050 = vrot.lane.b32.xlu0 %v872, 125
        %v2051 = vpop.permute.xlu0 %2050
        %2052 = vrot.lane.b32.xlu0 %v873, 125
        %v2053 = vpop.permute.xlu0 %2052
        %2054 = vrot.lane.b32.xlu0 %v874, 125
        %v2055 = vpop.permute.xlu0 %2054
        %2056 = vrot.lane.b32.xlu0 %v875, 125
        %v2057 = vpop.permute.xlu0 %2056
        %2058 = vrot.lane.b32.xlu0 %v876, 125
        %v2059 = vpop.permute.xlu0 %2058
        %2060 = vrot.lane.b32.xlu0 %v877, 125
        %v2061 = vpop.permute.xlu0 %2060
        %2062 = vrot.lane.b32.xlu0 %v878, 125
        %v2063 = vpop.permute.xlu0 %2062
        %2064 = vrot.lane.b32.xlu0 %v879, 125
        %v2065 = vpop.permute.xlu0 %2064
        %2066 = vrot.lane.b32.xlu0 %v880, 125
        %v2067 = vpop.permute.xlu0 %2066
        %2068 = vrot.lane.b32.xlu0 %v881, 125
        %v2069 = vpop.permute.xlu0 %2068
        %2070 = vrot.lane.b32.xlu0 %v882, 125
        %v2071 = vpop.permute.xlu0 %2070
        %2072 = vrot.lane.b32.xlu0 %v883, 125
        %v2073 = vpop.permute.xlu0 %2072
        %2074 = vrot.lane.b32.xlu0 %v884, 125
        %v2075 = vpop.permute.xlu0 %2074
        %2076 = vrot.lane.b32.xlu0 %v885, 125
        %v2077 = vpop.permute.xlu0 %2076
        %2078 = vrot.lane.b32.xlu0 %v886, 125
        %v2079 = vpop.permute.xlu0 %2078
        %v2112 = vmax.f32 %v1728, %v2017
        %v2113 = vmax.f32 %v1729, %v2019
        %v2114 = vmax.f32 %v1730, %v2021
        %v2115 = vmax.f32 %v1731, %v2023
        %v2116 = vmax.f32 %v1732, %v2025
        %v2117 = vmax.f32 %v1733, %v2027
        %v2118 = vmax.f32 %v1734, %v2029
        %v2119 = vmax.f32 %v1735, %v2031
        %v2120 = vmax.f32 %v1736, %v2033
        %v2121 = vmax.f32 %v1737, %v2035
        %v2122 = vmax.f32 %v1738, %v2037
        %v2123 = vmax.f32 %v1739, %v2039
        %v2124 = vmax.f32 %v1740, %v2041
        %v2125 = vmax.f32 %v1741, %v2043
        %v2126 = vmax.f32 %v1742, %v2045
        %v2127 = vmax.f32 %v1743, %v2047
        %v2128 = vmax.f32 %v1744, %v2049
        %v2129 = vmax.f32 %v1745, %v2051
        %v2130 = vmax.f32 %v1746, %v2053
        %v2131 = vmax.f32 %v1747, %v2055
        %v2132 = vmax.f32 %v1748, %v2057
        %v2133 = vmax.f32 %v1749, %v2059
        %v2134 = vmax.f32 %v1750, %v2061
        %v2135 = vmax.f32 %v1751, %v2063
        %v2136 = vmax.f32 %v1752, %v2065
        %v2137 = vmax.f32 %v1753, %v2067
        %v2138 = vmax.f32 %v1754, %v2069
        %v2139 = vmax.f32 %v1755, %v2071
        %v2140 = vmax.f32 %v1756, %v2073
        %v2141 = vmax.f32 %v1757, %v2075
        %v2142 = vmax.f32 %v1758, %v2077
        %v2143 = vmax.f32 %v1759, %v2079
        %2176 = vrot.lane.b32.xlu0 %v2112, 122
        %v2177 = vpop.permute.xlu0 %2176
        %2178 = vrot.lane.b32.xlu0 %v2113, 122
        %v2179 = vpop.permute.xlu0 %2178
        %2180 = vrot.lane.b32.xlu0 %v2114, 122
        %v2181 = vpop.permute.xlu0 %2180
        %2182 = vrot.lane.b32.xlu0 %v2115, 122
        %v2183 = vpop.permute.xlu0 %2182
        %2184 = vrot.lane.b32.xlu0 %v2116, 122
        %v2185 = vpop.permute.xlu0 %2184
        %2186 = vrot.lane.b32.xlu0 %v2117, 122
        %v2187 = vpop.permute.xlu0 %2186
        %2188 = vrot.lane.b32.xlu0 %v2118, 122
        %v2189 = vpop.permute.xlu0 %2188
        %2190 = vrot.lane.b32.xlu0 %v2119, 122
        %v2191 = vpop.permute.xlu0 %2190
        %2192 = vrot.lane.b32.xlu0 %v2120, 122
        %v2193 = vpop.permute.xlu0 %2192
        %2194 = vrot.lane.b32.xlu0 %v2121, 122
        %v2195 = vpop.permute.xlu0 %2194
        %2196 = vrot.lane.b32.xlu0 %v2122, 122
        %v2197 = vpop.permute.xlu0 %2196
        %2198 = vrot.lane.b32.xlu0 %v2123, 122
        %v2199 = vpop.permute.xlu0 %2198
        %2200 = vrot.lane.b32.xlu0 %v2124, 122
        %v2201 = vpop.permute.xlu0 %2200
        %2202 = vrot.lane.b32.xlu0 %v2125, 122
        %v2203 = vpop.permute.xlu0 %2202
        %2204 = vrot.lane.b32.xlu0 %v2126, 122
        %v2205 = vpop.permute.xlu0 %2204
        %2206 = vrot.lane.b32.xlu0 %v2127, 122
        %v2207 = vpop.permute.xlu0 %2206
        %2208 = vrot.lane.b32.xlu0 %v2128, 122
        %v2209 = vpop.permute.xlu0 %2208
        %2210 = vrot.lane.b32.xlu0 %v2129, 122
        %v2211 = vpop.permute.xlu0 %2210
        %2212 = vrot.lane.b32.xlu0 %v2130, 122
        %v2213 = vpop.permute.xlu0 %2212
        %2214 = vrot.lane.b32.xlu0 %v2131, 122
        %v2215 = vpop.permute.xlu0 %2214
        %2216 = vrot.lane.b32.xlu0 %v2132, 122
        %v2217 = vpop.permute.xlu0 %2216
        %2218 = vrot.lane.b32.xlu0 %v2133, 122
        %v2219 = vpop.permute.xlu0 %2218
        %2220 = vrot.lane.b32.xlu0 %v2134, 122
        %v2221 = vpop.permute.xlu0 %2220
        %2222 = vrot.lane.b32.xlu0 %v2135, 122
        %v2223 = vpop.permute.xlu0 %2222
        %2224 = vrot.lane.b32.xlu0 %v2136, 122
        %v2225 = vpop.permute.xlu0 %2224
        %2226 = vrot.lane.b32.xlu0 %v2137, 122
        %v2227 = vpop.permute.xlu0 %2226
        %2228 = vrot.lane.b32.xlu0 %v2138, 122
        %v2229 = vpop.permute.xlu0 %2228
        %2230 = vrot.lane.b32.xlu0 %v2139, 122
        %v2231 = vpop.permute.xlu0 %2230
        %2232 = vrot.lane.b32.xlu0 %v2140, 122
        %v2233 = vpop.permute.xlu0 %2232
        %2234 = vrot.lane.b32.xlu0 %v2141, 122
        %v2235 = vpop.permute.xlu0 %2234
        %2236 = vrot.lane.b32.xlu0 %v2142, 122
        %v2237 = vpop.permute.xlu0 %2236
        %2238 = vrot.lane.b32.xlu0 %v2143, 122
        %v2239 = vpop.permute.xlu0 %2238
        %v2272 = vmax.f32 %v1952, %v2177
        %v2273 = vmax.f32 %v1953, %v2179
        %v2274 = vmax.f32 %v1954, %v2181
        %v2275 = vmax.f32 %v1955, %v2183
        %v2276 = vmax.f32 %v1956, %v2185
        %v2277 = vmax.f32 %v1957, %v2187
        %v2278 = vmax.f32 %v1958, %v2189
        %v2279 = vmax.f32 %v1959, %v2191
        %v2280 = vmax.f32 %v1960, %v2193
        %v2281 = vmax.f32 %v1961, %v2195
        %v2282 = vmax.f32 %v1962, %v2197
        %v2283 = vmax.f32 %v1963, %v2199
        %v2284 = vmax.f32 %v1964, %v2201
        %v2285 = vmax.f32 %v1965, %v2203
        %v2286 = vmax.f32 %v1966, %v2205
        %v2287 = vmax.f32 %v1967, %v2207
        %v2288 = vmax.f32 %v1968, %v2209
        %v2289 = vmax.f32 %v1969, %v2211
        %v2290 = vmax.f32 %v1970, %v2213
        %v2291 = vmax.f32 %v1971, %v2215
        %v2292 = vmax.f32 %v1972, %v2217
        %v2293 = vmax.f32 %v1973, %v2219
        %v2294 = vmax.f32 %v1974, %v2221
        %v2295 = vmax.f32 %v1975, %v2223
        %v2296 = vmax.f32 %v1976, %v2225
        %v2297 = vmax.f32 %v1977, %v2227
        %v2298 = vmax.f32 %v1978, %v2229
        %v2299 = vmax.f32 %v1979, %v2231
        %v2300 = vmax.f32 %v1980, %v2233
        %v2301 = vmax.f32 %v1981, %v2235
        %v2302 = vmax.f32 %v1982, %v2237
        %v2303 = vmax.f32 %v1983, %v2239
        %2336 = vrot.lane.b32.xlu0 %v887, 122
        %v2337 = vpop.permute.xlu0 %2336
        %2338 = vrot.lane.b32.xlu0 %v888, 122
        %v2339 = vpop.permute.xlu0 %2338
        %2340 = vrot.lane.b32.xlu0 %v889, 122
        %v2341 = vpop.permute.xlu0 %2340
        %2342 = vrot.lane.b32.xlu0 %v890, 122
        %v2343 = vpop.permute.xlu0 %2342
        %2344 = vrot.lane.b32.xlu0 %v891, 122
        %v2345 = vpop.permute.xlu0 %2344
        %2346 = vrot.lane.b32.xlu0 %v892, 122
        %v2347 = vpop.permute.xlu0 %2346
        %2348 = vrot.lane.b32.xlu0 %v893, 122
        %v2349 = vpop.permute.xlu0 %2348
        %2350 = vrot.lane.b32.xlu0 %v894, 122
        %v2351 = vpop.permute.xlu0 %2350
        %2352 = vrot.lane.b32.xlu0 %v895, 122
        %v2353 = vpop.permute.xlu0 %2352
        %2354 = vrot.lane.b32.xlu0 %v896, 122
        %v2355 = vpop.permute.xlu0 %2354
        %2356 = vrot.lane.b32.xlu0 %v897, 122
        %v2357 = vpop.permute.xlu0 %2356
        %2358 = vrot.lane.b32.xlu0 %v898, 122
        %v2359 = vpop.permute.xlu0 %2358
        %2360 = vrot.lane.b32.xlu0 %v899, 122
        %v2361 = vpop.permute.xlu0 %2360
        %2362 = vrot.lane.b32.xlu0 %v900, 122
        %v2363 = vpop.permute.xlu0 %2362
        %2364 = vrot.lane.b32.xlu0 %v901, 122
        %v2365 = vpop.permute.xlu0 %2364
        %2366 = vrot.lane.b32.xlu0 %v902, 122
        %v2367 = vpop.permute.xlu0 %2366
        %2368 = vrot.lane.b32.xlu0 %v903, 122
        %v2369 = vpop.permute.xlu0 %2368
        %2370 = vrot.lane.b32.xlu0 %v904, 122
        %v2371 = vpop.permute.xlu0 %2370
        %2372 = vrot.lane.b32.xlu0 %v905, 122
        %v2373 = vpop.permute.xlu0 %2372
        %2374 = vrot.lane.b32.xlu0 %v906, 122
        %v2375 = vpop.permute.xlu0 %2374
        %2376 = vrot.lane.b32.xlu0 %v907, 122
        %v2377 = vpop.permute.xlu0 %2376
        %2378 = vrot.lane.b32.xlu0 %v908, 122
        %v2379 = vpop.permute.xlu0 %2378
        %2380 = vrot.lane.b32.xlu0 %v909, 122
        %v2381 = vpop.permute.xlu0 %2380
        %2382 = vrot.lane.b32.xlu0 %v910, 122
        %v2383 = vpop.permute.xlu0 %2382
        %2384 = vrot.lane.b32.xlu0 %v911, 122
        %v2385 = vpop.permute.xlu0 %2384
        %2386 = vrot.lane.b32.xlu0 %v912, 122
        %v2387 = vpop.permute.xlu0 %2386
        %2388 = vrot.lane.b32.xlu0 %v913, 122
        %v2389 = vpop.permute.xlu0 %2388
        %2390 = vrot.lane.b32.xlu0 %v914, 122
        %v2391 = vpop.permute.xlu0 %2390
        %2392 = vrot.lane.b32.xlu0 %v915, 122
        %v2393 = vpop.permute.xlu0 %2392
        %2394 = vrot.lane.b32.xlu0 %v916, 122
        %v2395 = vpop.permute.xlu0 %2394
        %2396 = vrot.lane.b32.xlu0 %v917, 122
        %v2397 = vpop.permute.xlu0 %2396
        %2398 = vrot.lane.b32.xlu0 %v918, 122
        %v2399 = vpop.permute.xlu0 %2398
        %v2432 = vmax.f32 %v1760, %v2337
        %v2433 = vmax.f32 %v1761, %v2339
        %v2434 = vmax.f32 %v1762, %v2341
        %v2435 = vmax.f32 %v1763, %v2343
        %v2436 = vmax.f32 %v1764, %v2345
        %v2437 = vmax.f32 %v1765, %v2347
        %v2438 = vmax.f32 %v1766, %v2349
        %v2439 = vmax.f32 %v1767, %v2351
        %v2440 = vmax.f32 %v1768, %v2353
        %v2441 = vmax.f32 %v1769, %v2355
        %v2442 = vmax.f32 %v1770, %v2357
        %v2443 = vmax.f32 %v1771, %v2359
        %v2444 = vmax.f32 %v1772, %v2361
        %v2445 = vmax.f32 %v1773, %v2363
        %v2446 = vmax.f32 %v1774, %v2365
        %v2447 = vmax.f32 %v1775, %v2367
        %v2448 = vmax.f32 %v1776, %v2369
        %v2449 = vmax.f32 %v1777, %v2371
        %v2450 = vmax.f32 %v1778, %v2373
        %v2451 = vmax.f32 %v1779, %v2375
        %v2452 = vmax.f32 %v1780, %v2377
        %v2453 = vmax.f32 %v1781, %v2379
        %v2454 = vmax.f32 %v1782, %v2381
        %v2455 = vmax.f32 %v1783, %v2383
        %v2456 = vmax.f32 %v1784, %v2385
        %v2457 = vmax.f32 %v1785, %v2387
        %v2458 = vmax.f32 %v1786, %v2389
        %v2459 = vmax.f32 %v1787, %v2391
        %v2460 = vmax.f32 %v1788, %v2393
        %v2461 = vmax.f32 %v1789, %v2395
        %v2462 = vmax.f32 %v1790, %v2397
        %v2463 = vmax.f32 %v1791, %v2399
        %2466 = vrot.lane.b32.xlu0 %v919, 125
        %v2467 = vpop.permute.xlu0 %2466
        %2468 = vrot.lane.b32.xlu0 %v920, 125
        %v2469 = vpop.permute.xlu0 %2468
        %v2472 = vmax.f32 %v1792, %v2021
        %v2473 = vmax.f32 %v1793, %v2023
        %v2474 = vmax.f32 %v1794, %v2025
        %v2475 = vmax.f32 %v1795, %v2027
        %v2476 = vmax.f32 %v1796, %v2029
        %v2477 = vmax.f32 %v1797, %v2031
        %v2478 = vmax.f32 %v1798, %v2033
        %v2479 = vmax.f32 %v1799, %v2035
        %v2480 = vmax.f32 %v1800, %v2037
        %v2481 = vmax.f32 %v1801, %v2039
        %v2482 = vmax.f32 %v1802, %v2041
        %v2483 = vmax.f32 %v1803, %v2043
        %v2484 = vmax.f32 %v1804, %v2045
        %v2485 = vmax.f32 %v1805, %v2047
        %v2486 = vmax.f32 %v1806, %v2049
        %v2487 = vmax.f32 %v1807, %v2051
        %v2488 = vmax.f32 %v1808, %v2053
        %v2489 = vmax.f32 %v1809, %v2055
        %v2490 = vmax.f32 %v1810, %v2057
        %v2491 = vmax.f32 %v1811, %v2059
        %v2492 = vmax.f32 %v1812, %v2061
        %v2493 = vmax.f32 %v1813, %v2063
        %v2494 = vmax.f32 %v1814, %v2065
        %v2495 = vmax.f32 %v1815, %v2067
        %v2496 = vmax.f32 %v1816, %v2069
        %v2497 = vmax.f32 %v1817, %v2071
        %v2498 = vmax.f32 %v1818, %v2073
        %v2499 = vmax.f32 %v1819, %v2075
        %v2500 = vmax.f32 %v1820, %v2077
        %v2501 = vmax.f32 %v1821, %v2079
        %v2502 = vmax.f32 %v1822, %v2467
        %v2503 = vmax.f32 %v1823, %v2469
        %v2504 = vmax.f32 %v2472, %v889
        %v2505 = vmax.f32 %v2473, %v890
        %v2506 = vmax.f32 %v2474, %v891
        %v2507 = vmax.f32 %v2475, %v892
        %v2508 = vmax.f32 %v2476, %v893
        %v2509 = vmax.f32 %v2477, %v894
        %v2510 = vmax.f32 %v2478, %v895
        %v2511 = vmax.f32 %v2479, %v896
        %v2512 = vmax.f32 %v2480, %v897
        %v2513 = vmax.f32 %v2481, %v898
        %v2514 = vmax.f32 %v2482, %v899
        %v2515 = vmax.f32 %v2483, %v900
        %v2516 = vmax.f32 %v2484, %v901
        %v2517 = vmax.f32 %v2485, %v902
        %v2518 = vmax.f32 %v2486, %v903
        %v2519 = vmax.f32 %v2487, %v904
        %v2520 = vmax.f32 %v2488, %v905
        %v2521 = vmax.f32 %v2489, %v906
        %v2522 = vmax.f32 %v2490, %v907
        %v2523 = vmax.f32 %v2491, %v908
        %v2524 = vmax.f32 %v2492, %v909
        %v2525 = vmax.f32 %v2493, %v910
        %v2526 = vmax.f32 %v2494, %v911
        %v2527 = vmax.f32 %v2495, %v912
        %v2528 = vmax.f32 %v2496, %v913
        %v2529 = vmax.f32 %v2497, %v914
        %v2530 = vmax.f32 %v2498, %v915
        %v2531 = vmax.f32 %v2499, %v916
        %v2532 = vmax.f32 %v2500, %v917
        %v2533 = vmax.f32 %v2501, %v918
        %v2534 = vmax.f32 %v2502, %v921
        %v2535 = vmax.f32 %v2503, %v922
        %v2536 = vmax.f32 %v2432, %v2504
        %v2537 = vmax.f32 %v2433, %v2505
        %v2538 = vmax.f32 %v2434, %v2506
        %v2539 = vmax.f32 %v2435, %v2507
        %v2540 = vmax.f32 %v2436, %v2508
        %v2541 = vmax.f32 %v2437, %v2509
        %v2542 = vmax.f32 %v2438, %v2510
        %v2543 = vmax.f32 %v2439, %v2511
        %v2544 = vmax.f32 %v2440, %v2512
        %v2545 = vmax.f32 %v2441, %v2513
        %v2546 = vmax.f32 %v2442, %v2514
        %v2547 = vmax.f32 %v2443, %v2515
        %v2548 = vmax.f32 %v2444, %v2516
        %v2549 = vmax.f32 %v2445, %v2517
        %v2550 = vmax.f32 %v2446, %v2518
        %v2551 = vmax.f32 %v2447, %v2519
        %v2552 = vmax.f32 %v2448, %v2520
        %v2553 = vmax.f32 %v2449, %v2521
        %v2554 = vmax.f32 %v2450, %v2522
        %v2555 = vmax.f32 %v2451, %v2523
        %v2556 = vmax.f32 %v2452, %v2524
        %v2557 = vmax.f32 %v2453, %v2525
        %v2558 = vmax.f32 %v2454, %v2526
        %v2559 = vmax.f32 %v2455, %v2527
        %v2560 = vmax.f32 %v2456, %v2528
        %v2561 = vmax.f32 %v2457, %v2529
        %v2562 = vmax.f32 %v2458, %v2530
        %v2563 = vmax.f32 %v2459, %v2531
        %v2564 = vmax.f32 %v2460, %v2532
        %v2565 = vmax.f32 %v2461, %v2533
        %v2566 = vmax.f32 %v2462, %v2534
        %v2567 = vmax.f32 %v2463, %v2535
        %v2568 = vmax.f32 %v2272, %v2536
        %v2569 = vmax.f32 %v2273, %v2537
        %v2570 = vmax.f32 %v2274, %v2538
        %v2571 = vmax.f32 %v2275, %v2539
        %v2572 = vmax.f32 %v2276, %v2540
        %v2573 = vmax.f32 %v2277, %v2541
        %v2574 = vmax.f32 %v2278, %v2542
        %v2575 = vmax.f32 %v2279, %v2543
        %v2576 = vmax.f32 %v2280, %v2544
        %v2577 = vmax.f32 %v2281, %v2545
        %v2578 = vmax.f32 %v2282, %v2546
        %v2579 = vmax.f32 %v2283, %v2547
        %v2580 = vmax.f32 %v2284, %v2548
        %v2581 = vmax.f32 %v2285, %v2549
        %v2582 = vmax.f32 %v2286, %v2550
        %v2583 = vmax.f32 %v2287, %v2551
        %v2584 = vmax.f32 %v2288, %v2552
        %v2585 = vmax.f32 %v2289, %v2553
        %v2586 = vmax.f32 %v2290, %v2554
        %v2587 = vmax.f32 %v2291, %v2555
        %v2588 = vmax.f32 %v2292, %v2556
        %v2589 = vmax.f32 %v2293, %v2557
        %v2590 = vmax.f32 %v2294, %v2558
        %v2591 = vmax.f32 %v2295, %v2559
        %v2592 = vmax.f32 %v2296, %v2560
        %v2593 = vmax.f32 %v2297, %v2561
        %v2594 = vmax.f32 %v2298, %v2562
        %v2595 = vmax.f32 %v2299, %v2563
        %v2596 = vmax.f32 %v2300, %v2564
        %v2597 = vmax.f32 %v2301, %v2565
        %v2598 = vmax.f32 %v2302, %v2566
        %v2599 = vmax.f32 %v2303, %v2567
        %v2600 = vpack.c.bf16 %v2569, %v2568
        %v2601 = vpack.c.bf16 %v2571, %v2570
        %v2602 = vpack.c.bf16 %v2573, %v2572
        %v2603 = vpack.c.bf16 %v2575, %v2574
        %v2604 = vpack.c.bf16 %v2577, %v2576
        %v2605 = vpack.c.bf16 %v2579, %v2578
        %v2606 = vpack.c.bf16 %v2581, %v2580
        %v2607 = vpack.c.bf16 %v2583, %v2582
        %v2608 = vpack.c.bf16 %v2585, %v2584
        %v2609 = vpack.c.bf16 %v2587, %v2586
        %v2610 = vpack.c.bf16 %v2589, %v2588
        %v2611 = vpack.c.bf16 %v2591, %v2590
        %v2612 = vpack.c.bf16 %v2593, %v2592
        %v2613 = vpack.c.bf16 %v2595, %v2594
        %v2614 = vpack.c.bf16 %v2597, %v2596
        %v2615 = vpack.c.bf16 %v2599, %v2598
        %v2648 = vunpack.c.l.b16 %v359
        %v2649 = vunpack.c.l.b16 %v360
        %v2650 = vunpack.c.l.b16 %v362
        %v2651 = vunpack.c.l.b16 %v363
        %v2652 = vunpack.c.l.b16 %v365
        %v2653 = vunpack.c.l.b16 %v366
        %v2654 = vunpack.c.l.b16 %v368
        %v2655 = vunpack.c.l.b16 %v369
        %v2656 = vunpack.c.l.b16 %v371
        %v2657 = vunpack.c.l.b16 %v372
        %v2658 = vunpack.c.l.b16 %v374
        %v2659 = vunpack.c.l.b16 %v375
        %v2660 = vunpack.c.l.b16 %v377
        %v2661 = vunpack.c.l.b16 %v378
        %v2662 = vunpack.c.l.b16 %v380
        %v2663 = vunpack.c.l.b16 %v381
        %v2664 = vunpack.c.l.b16 %v383
        %v2665 = vunpack.c.l.b16 %v384
        %v2666 = vunpack.c.l.b16 %v386
        %v2667 = vunpack.c.l.b16 %v387
        %v2668 = vunpack.c.l.b16 %v389
        %v2669 = vunpack.c.l.b16 %v390
        %v2670 = vunpack.c.l.b16 %v392
        %v2671 = vunpack.c.l.b16 %v393
        %v2672 = vunpack.c.l.b16 %v395
        %v2673 = vunpack.c.l.b16 %v396
        %v2674 = vunpack.c.l.b16 %v398
        %v2675 = vunpack.c.l.b16 %v399
        %v2676 = vunpack.c.l.b16 %v401
        %v2677 = vunpack.c.l.b16 %v402
        %v2678 = vunpack.c.l.b16 %v404
        %v2679 = vunpack.c.l.b16 %v405
        %v2680 = vpack.c.b16 %v2649, %v2648
        %v2681 = vpack.c.b16 %v2651, %v2650
        %v2682 = vpack.c.b16 %v2653, %v2652
        %v2683 = vpack.c.b16 %v2655, %v2654
        %v2684 = vpack.c.b16 %v2657, %v2656
        %v2685 = vpack.c.b16 %v2659, %v2658
        %v2686 = vpack.c.b16 %v2661, %v2660
        %v2687 = vpack.c.b16 %v2663, %v2662
        %v2688 = vpack.c.b16 %v2665, %v2664
        %v2689 = vpack.c.b16 %v2667, %v2666
        %v2690 = vpack.c.b16 %v2669, %v2668
        %v2691 = vpack.c.b16 %v2671, %v2670
        %v2692 = vpack.c.b16 %v2673, %v2672
        %v2693 = vpack.c.b16 %v2675, %v2674
        %v2694 = vpack.c.b16 %v2677, %v2676
        %v2695 = vpack.c.b16 %v2679, %v2678
        %v2696 = vunpack.c.l.b16 %v426
        %v2697 = vunpack.c.l.b16 %v436
        %v2698 = vunpack.c.l.b16 %v450
        %v2699 = vunpack.c.l.b16 %v460
        %v2700 = vunpack.c.l.b16 %v474
        %v2701 = vunpack.c.l.b16 %v484
        %v2702 = vunpack.c.l.b16 %v498
        %v2703 = vunpack.c.l.b16 %v508
        %v2704 = vunpack.c.l.b16 %v522
        %v2705 = vunpack.c.l.b16 %v532
        %v2706 = vunpack.c.l.b16 %v546
        %v2707 = vunpack.c.l.b16 %v556
        %v2708 = vunpack.c.l.b16 %v570
        %v2709 = vunpack.c.l.b16 %v580
        %v2710 = vunpack.c.l.b16 %v594
        %v2711 = vunpack.c.l.b16 %v604
        %v2712 = vunpack.c.l.b16 %v618
        %v2713 = vunpack.c.l.b16 %v628
        %v2714 = vunpack.c.l.b16 %v642
        %v2715 = vunpack.c.l.b16 %v652
        %v2716 = vunpack.c.l.b16 %v666
        %v2717 = vunpack.c.l.b16 %v676
        %v2718 = vunpack.c.l.b16 %v690
        %v2719 = vunpack.c.l.b16 %v700
        %v2720 = vunpack.c.l.b16 %v714
        %v2721 = vunpack.c.l.b16 %v724
        %v2722 = vunpack.c.l.b16 %v738
        %v2723 = vunpack.c.l.b16 %v748
        %v2724 = vunpack.c.l.b16 %v762
        %v2725 = vunpack.c.l.b16 %v772
        %v2726 = vunpack.c.l.b16 %v786
        %v2727 = vunpack.c.l.b16 %v796
        %v2728 = vpack.c.b16 %v2697, %v2696
        %v2729 = vpack.c.b16 %v2699, %v2698
        %v2730 = vpack.c.b16 %v2701, %v2700
        %v2731 = vpack.c.b16 %v2703, %v2702
        %v2732 = vpack.c.b16 %v2705, %v2704
        %v2733 = vpack.c.b16 %v2707, %v2706
        %v2734 = vpack.c.b16 %v2709, %v2708
        %v2735 = vpack.c.b16 %v2711, %v2710
        %v2736 = vpack.c.b16 %v2713, %v2712
        %v2737 = vpack.c.b16 %v2715, %v2714
        %v2738 = vpack.c.b16 %v2717, %v2716
        %v2739 = vpack.c.b16 %v2719, %v2718
        %v2740 = vpack.c.b16 %v2721, %v2720
        %v2741 = vpack.c.b16 %v2723, %v2722
        %v2742 = vpack.c.b16 %v2725, %v2724
        %v2743 = vpack.c.b16 %v2727, %v2726
        %2744 = vrot.lane.b32.xlu0 %v2728, 12
        %v2745 = vpop.permute.xlu0 %2744
        %2746 = vrot.lane.b32.xlu0 %v2729, 12
        %v2747 = vpop.permute.xlu0 %2746
        %2748 = vrot.lane.b32.xlu0 %v2730, 12
        %v2749 = vpop.permute.xlu0 %2748
        %2750 = vrot.lane.b32.xlu0 %v2731, 12
        %v2751 = vpop.permute.xlu0 %2750
        %2752 = vrot.lane.b32.xlu0 %v2732, 12
        %v2753 = vpop.permute.xlu0 %2752
        %2754 = vrot.lane.b32.xlu0 %v2733, 12
        %v2755 = vpop.permute.xlu0 %2754
        %2756 = vrot.lane.b32.xlu0 %v2734, 12
        %v2757 = vpop.permute.xlu0 %2756
        %2758 = vrot.lane.b32.xlu0 %v2735, 12
        %v2759 = vpop.permute.xlu0 %2758
        %2760 = vrot.lane.b32.xlu0 %v2736, 12
        %v2761 = vpop.permute.xlu0 %2760
        %2762 = vrot.lane.b32.xlu0 %v2737, 12
        %v2763 = vpop.permute.xlu0 %2762
        %2764 = vrot.lane.b32.xlu0 %v2738, 12
        %v2765 = vpop.permute.xlu0 %2764
        %2766 = vrot.lane.b32.xlu0 %v2739, 12
        %v2767 = vpop.permute.xlu0 %2766
        %2768 = vrot.lane.b32.xlu0 %v2740, 12
        %v2769 = vpop.permute.xlu0 %2768
        %2770 = vrot.lane.b32.xlu0 %v2741, 12
        %v2771 = vpop.permute.xlu0 %2770
        %2772 = vrot.lane.b32.xlu0 %v2742, 12
        %v2773 = vpop.permute.xlu0 %2772
        %2774 = vrot.lane.b32.xlu0 %v2743, 12
        %v2775 = vpop.permute.xlu0 %2774
        %v2778 = vunpack.c.l.b16 %v407
        %v2779 = vunpack.c.l.b16 %v408
        %v2780 = vpack.c.b16 %v2779, %v2778
        %2781 = vrot.lane.b32.xlu0 %v2681, 24
        %v2782 = vpop.permute.xlu0 %2781
        %2783 = vrot.lane.b32.xlu0 %v2682, 24
        %v2784 = vpop.permute.xlu0 %2783
        %2785 = vrot.lane.b32.xlu0 %v2683, 24
        %v2786 = vpop.permute.xlu0 %2785
        %2787 = vrot.lane.b32.xlu0 %v2684, 24
        %v2788 = vpop.permute.xlu0 %2787
        %2789 = vrot.lane.b32.xlu0 %v2685, 24
        %v2790 = vpop.permute.xlu0 %2789
        %2791 = vrot.lane.b32.xlu0 %v2686, 24
        %v2792 = vpop.permute.xlu0 %2791
        %2793 = vrot.lane.b32.xlu0 %v2687, 24
        %v2794 = vpop.permute.xlu0 %2793
        %2795 = vrot.lane.b32.xlu0 %v2688, 24
        %v2796 = vpop.permute.xlu0 %2795
        %2797 = vrot.lane.b32.xlu0 %v2689, 24
        %v2798 = vpop.permute.xlu0 %2797
        %2799 = vrot.lane.b32.xlu0 %v2690, 24
        %v2800 = vpop.permute.xlu0 %2799
        %2801 = vrot.lane.b32.xlu0 %v2691, 24
        %v2802 = vpop.permute.xlu0 %2801
        %2803 = vrot.lane.b32.xlu0 %v2692, 24
        %v2804 = vpop.permute.xlu0 %2803
        %2805 = vrot.lane.b32.xlu0 %v2693, 24
        %v2806 = vpop.permute.xlu0 %2805
        %2807 = vrot.lane.b32.xlu0 %v2694, 24
        %v2808 = vpop.permute.xlu0 %2807
        %2809 = vrot.lane.b32.xlu0 %v2695, 24
        %v2810 = vpop.permute.xlu0 %2809
        %2811 = vrot.lane.b32.xlu0 %v2780, 24
        %v2812 = vpop.permute.xlu0 %2811
        %v2813 = vunpack.c.l.b16 %v842
        %v2814 = vunpack.c.l.b16 %v852
        %v2815 = vpack.c.b16 %v2814, %v2813
        %2816 = vrot.lane.b32.xlu0 %v2729, 36
        %v2817 = vpop.permute.xlu0 %2816
        %2818 = vrot.lane.b32.xlu0 %v2730, 36
        %v2819 = vpop.permute.xlu0 %2818
        %2820 = vrot.lane.b32.xlu0 %v2731, 36
        %v2821 = vpop.permute.xlu0 %2820
        %2822 = vrot.lane.b32.xlu0 %v2732, 36
        %v2823 = vpop.permute.xlu0 %2822
        %2824 = vrot.lane.b32.xlu0 %v2733, 36
        %v2825 = vpop.permute.xlu0 %2824
        %2826 = vrot.lane.b32.xlu0 %v2734, 36
        %v2827 = vpop.permute.xlu0 %2826
        %2828 = vrot.lane.b32.xlu0 %v2735, 36
        %v2829 = vpop.permute.xlu0 %2828
        %2830 = vrot.lane.b32.xlu0 %v2736, 36
        %v2831 = vpop.permute.xlu0 %2830
        %2832 = vrot.lane.b32.xlu0 %v2737, 36
        %v2833 = vpop.permute.xlu0 %2832
        %2834 = vrot.lane.b32.xlu0 %v2738, 36
        %v2835 = vpop.permute.xlu0 %2834
        %2836 = vrot.lane.b32.xlu0 %v2739, 36
        %v2837 = vpop.permute.xlu0 %2836
        %2838 = vrot.lane.b32.xlu0 %v2740, 36
        %v2839 = vpop.permute.xlu0 %2838
        %2840 = vrot.lane.b32.xlu0 %v2741, 36
        %v2841 = vpop.permute.xlu0 %2840
        %2842 = vrot.lane.b32.xlu0 %v2742, 36
        %v2843 = vpop.permute.xlu0 %2842
        %2844 = vrot.lane.b32.xlu0 %v2743, 36
        %v2845 = vpop.permute.xlu0 %2844
        %2846 = vrot.lane.b32.xlu0 %v2815, 36
        %v2847 = vpop.permute.xlu0 %2846
        %2864 = vrot.lane.b32.xlu0 %v2600, 48
        %v2865 = vpop.permute.xlu0 %2864
        %2866 = vrot.lane.b32.xlu0 %v2601, 48
        %v2867 = vpop.permute.xlu0 %2866
        %2868 = vrot.lane.b32.xlu0 %v2602, 48
        %v2869 = vpop.permute.xlu0 %2868
        %2870 = vrot.lane.b32.xlu0 %v2603, 48
        %v2871 = vpop.permute.xlu0 %2870
        %2872 = vrot.lane.b32.xlu0 %v2604, 48
        %v2873 = vpop.permute.xlu0 %2872
        %2874 = vrot.lane.b32.xlu0 %v2605, 48
        %v2875 = vpop.permute.xlu0 %2874
        %2876 = vrot.lane.b32.xlu0 %v2606, 48
        %v2877 = vpop.permute.xlu0 %2876
        %2878 = vrot.lane.b32.xlu0 %v2607, 48
        %v2879 = vpop.permute.xlu0 %2878
        %2880 = vrot.lane.b32.xlu0 %v2608, 48
        %v2881 = vpop.permute.xlu0 %2880
        %2882 = vrot.lane.b32.xlu0 %v2609, 48
        %v2883 = vpop.permute.xlu0 %2882
        %2884 = vrot.lane.b32.xlu0 %v2610, 48
        %v2885 = vpop.permute.xlu0 %2884
        %2886 = vrot.lane.b32.xlu0 %v2611, 48
        %v2887 = vpop.permute.xlu0 %2886
        %2888 = vrot.lane.b32.xlu0 %v2612, 48
        %v2889 = vpop.permute.xlu0 %2888
        %2890 = vrot.lane.b32.xlu0 %v2613, 48
        %v2891 = vpop.permute.xlu0 %2890
        %2892 = vrot.lane.b32.xlu0 %v2614, 48
        %v2893 = vpop.permute.xlu0 %2892
        %2894 = vrot.lane.b32.xlu0 %v2615, 48
        %v2895 = vpop.permute.xlu0 %2894
        %vm2896 = vcmask 97280
        %v2899 = vsel %vm2896, %v2680, %v2745
        %v2902 = vsel %vm2896, %v2681, %v2747
        %v2905 = vsel %vm2896, %v2682, %v2749
        %v2908 = vsel %vm2896, %v2683, %v2751
        %v2911 = vsel %vm2896, %v2684, %v2753
        %v2914 = vsel %vm2896, %v2685, %v2755
        %v2917 = vsel %vm2896, %v2686, %v2757
        %v2920 = vsel %vm2896, %v2687, %v2759
        %v2923 = vsel %vm2896, %v2688, %v2761
        %v2926 = vsel %vm2896, %v2689, %v2763
        %v2929 = vsel %vm2896, %v2690, %v2765
        %v2932 = vsel %vm2896, %v2691, %v2767
        %v2935 = vsel %vm2896, %v2692, %v2769
        %v2938 = vsel %vm2896, %v2693, %v2771
        %v2941 = vsel %vm2896, %v2694, %v2773
        %v2944 = vsel %vm2896, %v2695, %v2775
        %vm2945 = vcmask 195584
        %v2947 = vsel %vm2945, %v2899, %v2782
        %v2949 = vsel %vm2945, %v2902, %v2784
        %v2951 = vsel %vm2945, %v2905, %v2786
        %v2953 = vsel %vm2945, %v2908, %v2788
        %v2955 = vsel %vm2945, %v2911, %v2790
        %v2957 = vsel %vm2945, %v2914, %v2792
        %v2959 = vsel %vm2945, %v2917, %v2794
        %v2961 = vsel %vm2945, %v2920, %v2796
        %v2963 = vsel %vm2945, %v2923, %v2798
        %v2965 = vsel %vm2945, %v2926, %v2800
        %v2967 = vsel %vm2945, %v2929, %v2802
        %v2969 = vsel %vm2945, %v2932, %v2804
        %v2971 = vsel %vm2945, %v2935, %v2806
        %v2973 = vsel %vm2945, %v2938, %v2808
        %v2975 = vsel %vm2945, %v2941, %v2810
        %v2977 = vsel %vm2945, %v2944, %v2812
        %vm2978 = vcmask 293888
        %v2980 = vsel %vm2978, %v2947, %v2817
        %v2982 = vsel %vm2978, %v2949, %v2819
        %v2984 = vsel %vm2978, %v2951, %v2821
        %v2986 = vsel %vm2978, %v2953, %v2823
        %v2988 = vsel %vm2978, %v2955, %v2825
        %v2990 = vsel %vm2978, %v2957, %v2827
        %v2992 = vsel %vm2978, %v2959, %v2829
        %v2994 = vsel %vm2978, %v2961, %v2831
        %v2996 = vsel %vm2978, %v2963, %v2833
        %v2998 = vsel %vm2978, %v2965, %v2835
        %v3000 = vsel %vm2978, %v2967, %v2837
        %v3002 = vsel %vm2978, %v2969, %v2839
        %v3004 = vsel %vm2978, %v2971, %v2841
        %v3006 = vsel %vm2978, %v2973, %v2843
        %v3008 = vsel %vm2978, %v2975, %v2845
        %v3010 = vsel %vm2978, %v2977, %v2847
        %vm3011 = vcmask 392192
        %v3013 = vsel %vm3011, %v2980, %v2865
        %v3015 = vsel %vm3011, %v2982, %v2867
        %v3017 = vsel %vm3011, %v2984, %v2869
        %v3019 = vsel %vm3011, %v2986, %v2871
        %v3021 = vsel %vm3011, %v2988, %v2873
        %v3023 = vsel %vm3011, %v2990, %v2875
        %v3025 = vsel %vm3011, %v2992, %v2877
        %v3027 = vsel %vm3011, %v2994, %v2879
        %v3029 = vsel %vm3011, %v2996, %v2881
        %v3031 = vsel %vm3011, %v2998, %v2883
        %v3033 = vsel %vm3011, %v3000, %v2885
        %v3035 = vsel %vm3011, %v3002, %v2887
        %v3037 = vsel %vm3011, %v3004, %v2889
        %v3039 = vsel %vm3011, %v3006, %v2891
        %v3041 = vsel %vm3011, %v3008, %v2893
        %v3043 = vsel %vm3011, %v3010, %v2895
        %v3044 = vld [vmem:[%s2] sm:$0xf]
        %v3045 = vld [vmem:[%s2 + $0x4] sm:$0xf]
        %v3048 = vunpack.c.l.b16 %v3044
        %v3049 = vunpack.c.l.b16 %v3045
        %v3050 = vpack.c.b16 %v3049, %v3048
        %vm3051 = vcmask 416768
        %v3053 = vsel %vm3051, %v3050, 0
        %v3055 = vsel %vm3051, %v3013, 0
        %v3057 = vsel %vm3051, %v3015, 0
        %v3059 = vsel %vm3051, %v3017, 0
        %v3061 = vsel %vm3051, %v3019, 0
        %v3063 = vsel %vm3051, %v3021, 0
        %v3065 = vsel %vm3051, %v3023, 0
        %v3067 = vsel %vm3051, %v3025, 0
        %v3069 = vsel %vm3051, %v3027, 0
        %v3071 = vsel %vm3051, %v3029, 0
        %v3073 = vsel %vm3051, %v3031, 0
        %v3075 = vsel %vm3051, %v3033, 0
        %v3077 = vsel %vm3051, %v3035, 0
        %v3079 = vsel %vm3051, %v3037, 0
        %v3081 = vsel %vm3051, %v3039, 0
        %v3083 = vsel %vm3051, %v3041, 0
        %v3085 = vsel %vm3051, %v3043, 0
        %3087 = vmatprep.subr.bf16.mxu0 0
        %3088 = vmatpush1.bf16.xpose.msra.mxu0 %v3055
        %3089 = vmatprep.subr.bf16.mxu0 0
        %3090 = vmatpush1.bf16.xpose.msra.mxu0 %v3057
        %3091 = vmatprep.subr.bf16.mxu0 0
        %3092 = vmatpush1.bf16.xpose.msra.mxu0 %v3059
        %3093 = vmatprep.subr.bf16.mxu0 0
        %3094 = vmatpush1.bf16.xpose.msra.mxu0 %v3061
        %3095 = vmatprep.subr.bf16.mxu0 0
        %3096 = vmatpush1.bf16.xpose.msra.mxu0 %v3063
        %3097 = vmatprep.subr.bf16.mxu0 0
        %3098 = vmatpush1.bf16.xpose.msra.mxu0 %v3065
        %3099 = vmatprep.subr.bf16.mxu0 0
        %3100 = vmatpush1.bf16.xpose.msra.mxu0 %v3067
        %3101 = vmatprep.subr.bf16.mxu0 0
        %3102 = vmatpush1.bf16.xpose.msra.mxu0 %v3069
        %3103 = vmatprep.subr.bf16.mxu0 0
        %3104 = vmatpush1.bf16.xpose.msra.mxu0 %v3071
        %3105 = vmatprep.subr.bf16.mxu0 0
        %3106 = vmatpush1.bf16.xpose.msra.mxu0 %v3073
        %3107 = vmatprep.subr.bf16.mxu0 0
        %3108 = vmatpush1.bf16.xpose.msra.mxu0 %v3075
        %3109 = vmatprep.subr.bf16.mxu0 0
        %3110 = vmatpush1.bf16.xpose.msra.mxu0 %v3077
        %3111 = vmatprep.subr.bf16.mxu0 0
        %3112 = vmatpush1.bf16.xpose.msra.mxu0 %v3079
        %3113 = vmatprep.subr.bf16.mxu0 0
        %3114 = vmatpush1.bf16.xpose.msra.mxu0 %v3081
        %3115 = vmatprep.subr.bf16.mxu0 0
        %3116 = vmatpush1.bf16.xpose.msra.mxu0 %v3083
        %3117 = vmatprep.subr.bf16.mxu0 0
        %3118 = vmatpush1.bf16.xpose.msra.mxu0 %v3085
        %3119 = vmatprep.mubr.bf16.mxu0 0
        %3120 = vmatmul.mubr.bf16.gmra.mrb[0].mxu0 %v3053
        %v3121 = vpop.f32.mrb[0].mxu0
        %v3122 = vadd.f32 0.0, %v3121
        %v3123 = vpop.f32.mrb[0].mxu0
        %v3124 = vadd.f32 0.0, %v3123
        %v3125 = vpop.f32.mrb[0].mxu0
        %v3126 = vadd.f32 0.0, %v3125
        %v3127 = vpop.f32.mrb[0].mxu0
        %v3128 = vadd.f32 0.0, %v3127
        %3129 = vdwg.mxu0
        %v3130 = vld [vmem:[%s3] sm:$0xff]
        %v3131 = vld [vmem:[%s3 + $0x8] sm:$0xff]
        %3133 = vset.pattern.permute.xlu0 0
        %3134 = vperm.xlu0 %3133, %v3130
        %v3135 = vpop.permute.xlu0 %3134
        %3138 = vset.pattern.permute.xlu0 0
        %3139 = vperm.xlu0 %3138, %v3131
        %v3140 = vpop.permute.xlu0 %3139
        %v3142 = vmul.f32 %v3122, %v3135
        %v3143 = vmul.f32 %v3124, %v3135
        %v3144 = vmul.f32 %v3126, %v3140
        %v3145 = vmul.f32 %v3128, %v3140
        %v3146 = vld [vmem:[%s4] sm:$0xff]
        %v3147 = vld [vmem:[%s4 + $0x8] sm:$0xff]
        %3149 = vset.pattern.permute.xlu0 0
        %3150 = vperm.xlu0 %3149, %v3146
        %v3151 = vpop.permute.xlu0 %3150
        %3154 = vset.pattern.permute.xlu0 0
        %3155 = vperm.xlu0 %3154, %v3147
        %v3156 = vpop.permute.xlu0 %3155
        %v3158 = vadd.f32 %v3142, %v3151
        %v3159 = vadd.f32 %v3143, %v3151
        %v3160 = vadd.f32 %v3144, %v3156
        %v3161 = vadd.f32 %v3145, %v3156
        %s3162 = sld [smem:[#allocation2]]
        %vm3163 = vcmp.ge.f32.partialorder %v3158, 0.0
        %vm3164 = vcmp.ge.f32.partialorder %v3159, 0.0
        %vm3165 = vcmp.ge.f32.partialorder %v3160, 0.0
        %vm3166 = vcmp.ge.f32.partialorder %v3161, 0.0
        %v3167 = vstv %s3162
        %v3168 = vmul.f32 %v3167, %v3158
        %v3169 = vmul.f32 %v3167, %v3159
        %v3170 = vmul.f32 %v3167, %v3160
        %v3171 = vmul.f32 %v3167, %v3161
        %v3172 = vsel %vm3163, %v3158, %v3168
        %v3173 = vsel %vm3164, %v3159, %v3169
        %v3174 = vsel %vm3165, %v3160, %v3170
        %v3175 = vsel %vm3166, %v3161, %v3171
        %3176 = vst [vmem:[%s322] sm:$0xff] %v3172
        %3177 = vst [vmem:[%s322 + $0x8] sm:$0xff] %v3173
        %3178 = vst [vmem:[%s322 + $0x10] sm:$0xff] %v3174
        %3179 = vst [vmem:[%s322 + $0x18] sm:$0xff] %v3175
        %s3180 = sand.u32 %s187, 1
        %s3181 = scalar_lea.sflag [#allocation4], %s3180
        %s3182 = sand.u32 %s187, 1
        %s3183 = smul.addr %s3182, 32
        %s3184 = scalar_lea.vmem [#allocation3], %s3183
        // Predicated region
        $region45: #{tpu_custom_call.1} parent=43 // pred_check
          %p3185 = pneg %p197
        $region46: #{tpu_custom_call.1} parent=43 // pred_check_branch
          %3187 = sbr.rel (%p3185) target = $region48
        $region47: #{tpu_custom_call.1} parent=43 // pred_region
          %s3188 = smul.u32 2, %s26
          %s3190 = ssub.s32 512, 512
          %3191 = vsyncadd %s3181, %s3190
          %s3192 = smul.addr %s25, 4
          %s3193 = sadd.s32 %s3188, %s3192
          %s3194 = smul.addr %s3193, 128
          %s3195 = scalar_lea.hbm %s6, %s3194
          %s3196 = sshll.u32 %s3184, 4
          %s3197 = int_to_ptr.vmem [resolvable:$true] %s3196
          %3202 = dma.vmem_to_hbm [thread:$0]  %s3197, 512, %s3195, %s3181, 256, 256, 16
        $region48: #{tpu_custom_call.1} parent=43 // pred_fallthru
          _
      $region44: #{tpu_custom_call.1} parent=5 // pred_fallthru
        _
      %p3203 = scmp.le.s32.totalorder 2, %s16
      // Predicated region
      $region49: #{tpu_custom_call.1} parent=5 // pred_check
        %p3204 = pneg %p3203
      $region50: #{tpu_custom_call.1} parent=5 // pred_check_branch
        %3206 = sbr.rel (%p3204) target = $region52
      $region51: #{tpu_custom_call.1} parent=5 // pred_region
        %s3207 = ssub.s32 %s16, 2
        // Predicated region
        $region53: #{tpu_custom_call.1} parent=51 // pred_check
          %p3208 = pneg %p203
        $region54: #{tpu_custom_call.1} parent=51 // pred_check_branch
          %3210 = sbr.rel (%p3208) target = $region56
        $region55: #{tpu_custom_call.1} parent=51 // pred_region
          %s3211 = sand.u32 %s188, 1
          %s3212 = scalar_lea.sflag [#allocation4], %s3211
          %s3213 = sand.u32 %s188, 1
          %s3214 = smul.addr %s3213, 32
          %s3215 = scalar_lea.vmem [#allocation3], %s3214
          %3216 = dma.done %s3212, 512
        $region56: #{tpu_custom_call.1} parent=51 // pred_fallthru
          _
      $region52: #{tpu_custom_call.1} parent=5 // pred_fallthru
        _
    $region6: #{tpu_custom_call.1} parent=1 // loop_footer
      %s20 = sadd.s32 1, %s16
    $region7: #{tpu_custom_call.1} parent=1 // loop_footer_branch
      %15 = sbr.rel target = $region3
    $region8: #{tpu_custom_call.1} parent=1 // loop_exit
      _
    %3217 = vsyncpa [#allocation4], 1
    %s3218 = scalar_lea.sflag [#allocation4], 1
    %3219 = vsyncpa %s3218, 1

</llo_original>
